<compile_context>
chip_gen: v7x
topology: tpu7x:2x2x1
jax: 0.10.0
libtpu: 0.0.40
codegen_flags: <defaults>
</compile_context>

<pallas_src>
import functools

import jax
import jax.numpy as jnp
from jax.experimental import pallas as pl
from jax.experimental.pallas import tpu as pltpu

EPS = 1e-5
LANE = 128
VMEM_LIMIT = 32 * 1024 * 1024


def _round_up(n, m):
    return ((n + m - 1) // m) * m


def _largest_divisor_leq(n, cap):
    for d in range(min(n, cap), 0, -1):
        if n % d == 0:
            return d
    return 1


# ----------------------------------------------------------------------------
# Fused Conv3x3(valid) + bias + BatchNorm(train stats) + ReLU
# ----------------------------------------------------------------------------
def _conv_bn_relu_kernel(x0_ref, x1_ref, x2_ref, w_ref, b_ref, g_ref, be_ref,
                         o_ref, sum_ref, ssq_ref, *, m_total):
    # x{r}_ref : (1, 1, W_in, Cin_p)  input row i+r of image n (r = 0,1,2)
    # w_ref    : (3, 3, Cin_p, Cout_p)  zero-padded conv weight (VMEM resident)
    # b/g/be   : (1, Cout_p)            conv bias / BN gamma / BN beta (padded)
    # o_ref    : (1, 1, W_out, Cout_p)  lane-dense output row
    # sum/ssq  : (1, Cout_p) f32 VMEM scratch — BN sum and sum-of-squares
    p = pl.program_id(0)   # 0: accumulate stats, 1: normalize + write
    n = pl.program_id(1)
    i = pl.program_id(2)

    w_out = o_ref.shape[2]
    coutp = o_ref.shape[3]

    @pl.when((p == 0) & (n == 0) & (i == 0))
    def _init():
        sum_ref[...] = jnp.zeros_like(sum_ref)
        ssq_ref[...] = jnp.zeros_like(ssq_ref)

    # 3x3 valid conv for one output row: 9 shifted MXU matmuls, f32 accumulate.
    acc = jnp.zeros((w_out, coutp), jnp.float32)
    for kh, x_ref in enumerate((x0_ref, x1_ref, x2_ref)):
        xr = x_ref[...].reshape(x_ref.shape[2], x_ref.shape[3])  # (W_in, Cin_p)
        for kw in range(3):
            acc += jnp.dot(xr[kw:kw + w_out, :], w_ref[kh, kw],
                           preferred_element_type=jnp.float32)
    y = acc + b_ref[...]                                          # (W_out, Cout_p)

    @pl.when(p == 0)
    def _accumulate_stats():
        sum_ref[...] += jnp.sum(y, axis=0, keepdims=True)
        ssq_ref[...] += jnp.sum(y * y, axis=0, keepdims=True)

    @pl.when(p == 1)
    def _normalize_and_store():
        inv_m = 1.0 / m_total                       # true element count (no pad rows)
        mean = sum_ref[...] * inv_m
        var = jnp.maximum(ssq_ref[...] * inv_m - mean * mean, 0.0)
        inv_std = jax.lax.rsqrt(var + EPS)          # EUP; off the VALU path
        out = g_ref[...] * ((y - mean) * inv_std) + be_ref[...]
        o_ref[...] = jnp.maximum(out, 0.0).reshape(o_ref.shape)   # ReLU


def conv_bn_relu(x_p, weight, bias, gamma, beta, *, compute_dtype=jnp.float32):
    """x_p: (N, H, W, Cin_p) channel-padded NHWC f32.  Returns (N, H-2, W-2, Cout_p)."""
    n_b, h_in, w_in, cinp = x_p.shape
    kh_, kw_, cin, cout = weight.shape
    assert kh_ == 3 and kw_ == 3 and cin <= cinp
    h1, w1 = h_in - 2, w_in - 2
    coutp = _round_up(cout, LANE)

    # Zero-pad parameters to lane-dense channel counts (exact: pads contribute 0).
    w_pad = jnp.zeros((3, 3, cinp, coutp), jnp.float32).at[:, :, :cin, :cout].set(weight)
    b_pad = jnp.zeros((1, coutp), jnp.float32).at[:, :cout].set(bias.reshape(1, -1))
    g_pad = jnp.zeros((1, coutp), jnp.float32).at[:, :cout].set(gamma.reshape(1, -1))
    be_pad = jnp.zeros((1, coutp), jnp.float32).at[:, :cout].set(beta.reshape(1, -1))

    x_c = x_p.astype(compute_dtype)            # bf16 on v6e/v7x halves DMA + fills MXU
    w_c = w_pad.astype(compute_dtype)

    kernel = functools.partial(_conv_bn_relu_kernel, m_total=float(n_b * h1 * w1))

    def x_spec(r):
        # H block size 1 => returned block index along H is an element row index.
        return pl.BlockSpec((1, 1, w_in, cinp),
                            lambda p, nn, i, r=r: (nn, i + r, 0, 0))

    vec_spec = pl.BlockSpec((1, coutp), lambda p, nn, i: (0, 0))

    return pl.pallas_call(
        kernel,
        out_shape=jax.ShapeDtypeStruct((n_b, h1, w1, coutp), jnp.float32),
        grid=(2, n_b, h1),                       # (pass, image, output row)
        in_specs=[x_spec(0), x_spec(1), x_spec(2),
                  pl.BlockSpec((3, 3, cinp, coutp), lambda p, nn, i: (0, 0, 0, 0)),
                  vec_spec, vec_spec, vec_spec],
        out_specs=pl.BlockSpec((1, 1, w1, coutp), lambda p, nn, i: (nn, i, 0, 0)),
        scratch_shapes=[pltpu.VMEM((1, coutp), jnp.float32),
                        pltpu.VMEM((1, coutp), jnp.float32)],
        compiler_params=pltpu.CompilerParams(
            # All axes "arbitrary": every step reads/writes the shared BN
            # sum/sumsq scratch, so the grid must run sequentially on one core.
            dimension_semantics=("arbitrary", "arbitrary", "arbitrary"),
            vmem_limit_bytes=VMEM_LIMIT),
    )(x_c, x_c, x_c, w_c, b_pad, g_pad, be_pad)


# ----------------------------------------------------------------------------
# 2x2 / stride-2 max pool (single pass over the input, lane-dense output)
# ----------------------------------------------------------------------------
def _maxpool_kernel(x_ref, o_ref):
    x = x_ref[...]                     # (tr, 2, Wo, 2, C_p)
    m = jnp.max(x, axis=3)             # max over the W pair
    o_ref[...] = jnp.max(m, axis=1)    # max over the H pair -> (tr, Wo, C_p)


def maxpool_2x2(h):
    """h: (N, H, W, C_p) with H, W even, C_p lane-dense. Returns (N, H//2, W//2, C_p)."""
    n_b, hh, ww, cp = h.shape
    ho, wo = hh // 2, ww // 2
    rows = n_b * ho
    hr = h.reshape(rows, 2, wo, 2, cp)             # free row-major reshape
    tr = _largest_divisor_leq(rows, 8)
    out = pl.pallas_call(
        _maxpool_kernel,
        out_shape=jax.ShapeDtypeStruct((rows, wo, cp), h.dtype),
        grid=(rows // tr,),
        in_specs=[pl.BlockSpec((tr, 2, wo, 2, cp), lambda i: (i, 0, 0, 0, 0))],
        out_specs=pl.BlockSpec((tr, wo, cp), lambda i: (i, 0, 0)),
        compiler_params=pltpu.CompilerParams(
            dimension_semantics=("parallel",),
            vmem_limit_bytes=VMEM_LIMIT),
    )(hr)
    return out.reshape(n_b, ho, wo, cp)


# ----------------------------------------------------------------------------
# Full block
# ----------------------------------------------------------------------------
def encoder_block_forward(x_nchw, params, *, compute_dtype=jnp.float32):
    """_EncoderBlock forward. x_nchw: (N, Cin, H, W) like PyTorch; returns NCHW."""
    (w1, b1, g1, be1, w2, b2, g2, be2) = params
    n_b, cin, _, _ = x_nchw.shape
    cinp = _round_up(cin, LANE)

    x = jnp.transpose(x_nchw, (0, 2, 3, 1))        # NCHW -> NHWC
    if cinp != cin:
        x = jnp.pad(x, ((0, 0), (0, 0), (0, 0), (0, cinp - cin)))

    h = conv_bn_relu(x, w1, b1, g1, be1, compute_dtype=compute_dtype)
    h = conv_bn_relu(h, w2, b2, g2, be2, compute_dtype=compute_dtype)
    # TODO(synk): nn.Dropout branch omitted (dropout=False by default; identity in eval).
    h = maxpool_2x2(h)

    cout = w2.shape[-1]
    h = h[..., :cout]                               # drop lane padding
    return jnp.transpose(h, (0, 3, 1, 2))           # back to NCHW


# ----------------------------------------------------------------------------
# Pure-JAX reference (same math, XLA ops) for verification
# ----------------------------------------------------------------------------
def _reference(x_nchw, params):
    (w1, b1, g1, be1, w2, b2, g2, be2) = params
    x = jnp.transpose(x_nchw, (0, 2, 3, 1))

    def conv(x, w, b):
        y = jax.lax.conv_general_dilated(
            x, w, (1, 1), "VALID",
            dimension_numbers=("NHWC", "HWIO", "NHWC"),
            precision=jax.lax.Precision.HIGHEST)
        return y + b

    def bn(y, g, be):
        mean = y.mean(axis=(0, 1, 2), keepdims=True)
        var = ((y - mean) ** 2).mean(axis=(0, 1, 2), keepdims=True)
        return g * (y - mean) / jnp.sqrt(var + EPS) + be

    h = jnp.maximum(bn(conv(x, w1, b1), g1, be1), 0.0)
    h = jnp.maximum(bn(conv(h, w2, b2), g2, be2), 0.0)
    N, H, W, C = h.shape
    h = h.reshape(N, H // 2, 2, W // 2, 2, C).max(axis=(2, 4))
    return jnp.transpose(h, (0, 3, 1, 2))


# ----------------------------------------------------------------------------
if __name__ == "__main__":
    N, Cin, Cout, H, W = 2, 4, 8, 16, 16

    key = jax.random.PRNGKey(0)
    kx, kw1, kb1, kw2, kb2, kg1, kbe1, kg2, kbe2 = jax.random.split(key, 9)

    x = jax.random.normal(kx, (N, Cin, H, W), dtype=jnp.float32)  # NCHW like PyTorch

    # Deterministic synthetic parameters (shapes per nn.Conv2d / nn.BatchNorm2d).
    w1 = jax.random.normal(kw1, (3, 3, Cin, Cout), jnp.float32) * (1.0 / jnp.sqrt(9.0 * Cin))
    b1 = jax.random.normal(kb1, (Cout,), jnp.float32) * 0.05
    g1 = 1.0 + 0.1 * jax.random.normal(kg1, (Cout,), jnp.float32)   # BN weight
    be1 = 0.1 * jax.random.normal(kbe1, (Cout,), jnp.float32)       # BN bias
    w2 = jax.random.normal(kw2, (3, 3, Cout, Cout), jnp.float32) * (1.0 / jnp.sqrt(9.0 * Cout))
    b2 = jax.random.normal(kb2, (Cout,), jnp.float32) * 0.05
    g2 = 1.0 + 0.1 * jax.random.normal(kg2, (Cout,), jnp.float32)
    be2 = 0.1 * jax.random.normal(kbe2, (Cout,), jnp.float32)

    params = (w1, b1, g1, be1, w2, b2, g2, be2)

    ref = jax.block_until_ready(_reference(x, params))

    # f32 MXU operands: tight correctness check.
    out = jax.block_until_ready(encoder_block_forward(x, params))
    assert out.shape == (N, Cout, 6, 6), out.shape
    assert jnp.allclose(out, ref, rtol=1e-3, atol=1e-3), (
        "f32 mismatch vs reference, max abs diff = %e" % float(jnp.abs(out - ref).max()))

    # bf16 MXU operands (recommended perf path on v6e/v7x): loose sanity check.
    out_bf16 = jax.block_until_ready(
        encoder_block_forward(x, params, compute_dtype=jnp.bfloat16))
    assert out_bf16.shape == (N, Cout, 6, 6), out_bf16.shape
    assert jnp.allclose(out_bf16, ref, rtol=1e-1, atol=1e-1), (
        "bf16 mismatch vs reference, max abs diff = %e" % float(jnp.abs(out_bf16 - ref).max()))

    print("KERNEL_OK")
</pallas_src>

<mosaic_0001>
module attributes {stable_mosaic.version = 11 : i64} {
  func.func @_conv_bn_relu_kernel(%arg0: i32, %arg1: i32, %arg2: i32, %arg3: memref<1x1x16x128xf32, #tpu.memory_space<vmem>>, %arg4: memref<1x1x16x128xf32, #tpu.memory_space<vmem>>, %arg5: memref<1x1x16x128xf32, #tpu.memory_space<vmem>>, %arg6: memref<3x3x128x128xf32, #tpu.memory_space<vmem>>, %arg7: memref<1x128xf32, #tpu.memory_space<vmem>>, %arg8: memref<1x128xf32, #tpu.memory_space<vmem>>, %arg9: memref<1x128xf32, #tpu.memory_space<vmem>>, %arg10: memref<1x1x14x128xf32, #tpu.memory_space<vmem>>, %arg11: memref<1x128xf32, #tpu.memory_space<vmem>>, %arg12: memref<1x128xf32, #tpu.memory_space<vmem>>) attributes {dimension_semantics = [#tpu.dimension_semantics<arbitrary>, #tpu.dimension_semantics<arbitrary>, #tpu.dimension_semantics<arbitrary>], iteration_bounds = array<i64: 2, 2, 14>, scalar_prefetch = 0 : i64, scratch_operands = 2 : i64, tpu.core_type = #tpu.core_type<tc>, window_params = [{transform_indices = @transform_0, window_bounds = array<i64: 1, 1, 16, 128>}, {transform_indices = @transform_1, window_bounds = array<i64: 1, 1, 16, 128>}, {transform_indices = @transform_2, window_bounds = array<i64: 1, 1, 16, 128>}, {pipeline_mode = #tpu.pipeline_mode<synchronous>, transform_indices = @transform_3, window_bounds = array<i64: 3, 3, 128, 128>}, {pipeline_mode = #tpu.pipeline_mode<synchronous>, transform_indices = @transform_4, window_bounds = array<i64: 1, 128>}, {pipeline_mode = #tpu.pipeline_mode<synchronous>, transform_indices = @transform_5, window_bounds = array<i64: 1, 128>}, {pipeline_mode = #tpu.pipeline_mode<synchronous>, transform_indices = @transform_6, window_bounds = array<i64: 1, 128>}, {transform_indices = @transform_7, window_bounds = array<i64: 1, 1, 14, 128>}]} {
    %c0_i32 = arith.constant 0 : i32
    %0 = arith.cmpi eq, %arg0, %c0_i32 : i32
    %c0_i32_0 = arith.constant 0 : i32
    %1 = arith.cmpi eq, %arg1, %c0_i32_0 : i32
    %2 = arith.andi %0, %1 : i1
    %c0_i32_1 = arith.constant 0 : i32
    %3 = arith.cmpi eq, %arg2, %c0_i32_1 : i32
    %4 = arith.andi %2, %3 : i1
    %5 = arith.extui %4 : i1 to i32
    %c0_i32_2 = arith.constant 0 : i32
    %6 = arith.cmpi ne, %5, %c0_i32_2 : i32
    scf.if %6 {
      %cst_62 = arith.constant 0.000000e+00 : f32
      %68 = vector.broadcast %cst_62 : f32 to vector<1x128xf32>
      %c0_63 = arith.constant 0 : index
      %c0_64 = arith.constant 0 : index
      %69 = vector.load %arg11[%c0_63, %c0_64] : memref<1x128xf32, #tpu.memory_space<vmem>>, vector<1x128xf32>
      tpu.vector_store %arg11[%c0_63, %c0_64], %68 {strides = array<i32>} : memref<1x128xf32, #tpu.memory_space<vmem>>, vector<1x128xf32>,
      %cst_65 = arith.constant 0.000000e+00 : f32
      %70 = vector.broadcast %cst_65 : f32 to vector<1x128xf32>
      %c0_66 = arith.constant 0 : index
      %c0_67 = arith.constant 0 : index
      %71 = vector.load %arg12[%c0_66, %c0_67] : memref<1x128xf32, #tpu.memory_space<vmem>>, vector<1x128xf32>
      tpu.vector_store %arg12[%c0_66, %c0_67], %70 {strides = array<i32>} : memref<1x128xf32, #tpu.memory_space<vmem>>, vector<1x128xf32>,
    } else {
    }
    %cst = arith.constant 0.000000e+00 : f32
    %7 = vector.broadcast %cst : f32 to vector<14x128xf32>
    %c0 = arith.constant 0 : index
    %c0_3 = arith.constant 0 : index
    %c0_4 = arith.constant 0 : index
    %c0_5 = arith.constant 0 : index
    %8 = vector.load %arg3[%c0, %c0_3, %c0_4, %c0_5] : memref<1x1x16x128xf32, #tpu.memory_space<vmem>>, vector<1x1x16x128xf32>
    %9 = vector.shape_cast %8 : vector<1x1x16x128xf32> to vector<16x128xf32>
    %10 = vector.extract_strided_slice %9 {offsets = [0, 0], sizes = [14, 128], strides = [1, 1]} : vector<16x128xf32> to vector<14x128xf32>
    %c0_6 = arith.constant 0 : index
    %c0_7 = arith.constant 0 : index
    %c0_8 = arith.constant 0 : index
    %c0_9 = arith.constant 0 : index
    %11 = vector.load %arg6[%c0_6, %c0_7, %c0_8, %c0_9] : memref<3x3x128x128xf32, #tpu.memory_space<vmem>>, vector<1x1x128x128xf32>
    %12 = vector.shape_cast %11 : vector<1x1x128x128xf32> to vector<128x128xf32>
    %cst_10 = arith.constant dense<0.000000e+00> : vector<14x128xf32>
    %13 = tpu.matmul %10, %12, %cst_10 {dimension_numbers = #tpu.dot_dimension_numbers<[1], [0], [0], [1], [0, 0, 1, 1], [], []>} : vector<14x128xf32>, vector<128x128xf32>, vector<14x128xf32> -> vector<14x128xf32>
    %14 = arith.addf %7, %13 : vector<14x128xf32>
    %15 = vector.extract_strided_slice %9 {offsets = [1, 0], sizes = [14, 128], strides = [1, 1]} : vector<16x128xf32> to vector<14x128xf32>
    %c0_11 = arith.constant 0 : index
    %c1 = arith.constant 1 : index
    %c0_12 = arith.constant 0 : index
    %c0_13 = arith.constant 0 : index
    %16 = vector.load %arg6[%c0_11, %c1, %c0_12, %c0_13] : memref<3x3x128x128xf32, #tpu.memory_space<vmem>>, vector<1x1x128x128xf32>
    %17 = vector.shape_cast %16 : vector<1x1x128x128xf32> to vector<128x128xf32>
    %cst_14 = arith.constant dense<0.000000e+00> : vector<14x128xf32>
    %18 = tpu.matmul %15, %17, %cst_14 {dimension_numbers = #tpu.dot_dimension_numbers<[1], [0], [0], [1], [0, 0, 1, 1], [], []>} : vector<14x128xf32>, vector<128x128xf32>, vector<14x128xf32> -> vector<14x128xf32>
    %19 = arith.addf %14, %18 : vector<14x128xf32>
    %20 = vector.extract_strided_slice %9 {offsets = [2, 0], sizes = [14, 128], strides = [1, 1]} : vector<16x128xf32> to vector<14x128xf32>
    %c0_15 = arith.constant 0 : index
    %c2 = arith.constant 2 : index
    %c0_16 = arith.constant 0 : index
    %c0_17 = arith.constant 0 : index
    %21 = vector.load %arg6[%c0_15, %c2, %c0_16, %c0_17] : memref<3x3x128x128xf32, #tpu.memory_space<vmem>>, vector<1x1x128x128xf32>
    %22 = vector.shape_cast %21 : vector<1x1x128x128xf32> to vector<128x128xf32>
    %cst_18 = arith.constant dense<0.000000e+00> : vector<14x128xf32>
    %23 = tpu.matmul %20, %22, %cst_18 {dimension_numbers = #tpu.dot_dimension_numbers<[1], [0], [0], [1], [0, 0, 1, 1], [], []>} : vector<14x128xf32>, vector<128x128xf32>, vector<14x128xf32> -> vector<14x128xf32>
    %24 = arith.addf %19, %23 : vector<14x128xf32>
    %c0_19 = arith.constant 0 : index
    %c0_20 = arith.constant 0 : index
    %c0_21 = arith.constant 0 : index
    %c0_22 = arith.constant 0 : index
    %25 = vector.load %arg4[%c0_19, %c0_20, %c0_21, %c0_22] : memref<1x1x16x128xf32, #tpu.memory_space<vmem>>, vector<1x1x16x128xf32>
    %26 = vector.shape_cast %25 : vector<1x1x16x128xf32> to vector<16x128xf32>
    %27 = vector.extract_strided_slice %26 {offsets = [0, 0], sizes = [14, 128], strides = [1, 1]} : vector<16x128xf32> to vector<14x128xf32>
    %c1_23 = arith.constant 1 : index
    %c0_24 = arith.constant 0 : index
    %c0_25 = arith.constant 0 : index
    %c0_26 = arith.constant 0 : index
    %28 = vector.load %arg6[%c1_23, %c0_24, %c0_25, %c0_26] : memref<3x3x128x128xf32, #tpu.memory_space<vmem>>, vector<1x1x128x128xf32>
    %29 = vector.shape_cast %28 : vector<1x1x128x128xf32> to vector<128x128xf32>
    %cst_27 = arith.constant dense<0.000000e+00> : vector<14x128xf32>
    %30 = tpu.matmul %27, %29, %cst_27 {dimension_numbers = #tpu.dot_dimension_numbers<[1], [0], [0], [1], [0, 0, 1, 1], [], []>} : vector<14x128xf32>, vector<128x128xf32>, vector<14x128xf32> -> vector<14x128xf32>
    %31 = arith.addf %24, %30 : vector<14x128xf32>
    %32 = vector.extract_strided_slice %26 {offsets = [1, 0], sizes = [14, 128], strides = [1, 1]} : vector<16x128xf32> to vector<14x128xf32>
    %c1_28 = arith.constant 1 : index
    %c1_29 = arith.constant 1 : index
    %c0_30 = arith.constant 0 : index
    %c0_31 = arith.constant 0 : index
    %33 = vector.load %arg6[%c1_28, %c1_29, %c0_30, %c0_31] : memref<3x3x128x128xf32, #tpu.memory_space<vmem>>, vector<1x1x128x128xf32>
    %34 = vector.shape_cast %33 : vector<1x1x128x128xf32> to vector<128x128xf32>
    %cst_32 = arith.constant dense<0.000000e+00> : vector<14x128xf32>
    %35 = tpu.matmul %32, %34, %cst_32 {dimension_numbers = #tpu.dot_dimension_numbers<[1], [0], [0], [1], [0, 0, 1, 1], [], []>} : vector<14x128xf32>, vector<128x128xf32>, vector<14x128xf32> -> vector<14x128xf32>
    %36 = arith.addf %31, %35 : vector<14x128xf32>
    %37 = vector.extract_strided_slice %26 {offsets = [2, 0], sizes = [14, 128], strides = [1, 1]} : vector<16x128xf32> to vector<14x128xf32>
    %c1_33 = arith.constant 1 : index
    %c2_34 = arith.constant 2 : index
    %c0_35 = arith.constant 0 : index
    %c0_36 = arith.constant 0 : index
    %38 = vector.load %arg6[%c1_33, %c2_34, %c0_35, %c0_36] : memref<3x3x128x128xf32, #tpu.memory_space<vmem>>, vector<1x1x128x128xf32>
    %39 = vector.shape_cast %38 : vector<1x1x128x128xf32> to vector<128x128xf32>
    %cst_37 = arith.constant dense<0.000000e+00> : vector<14x128xf32>
    %40 = tpu.matmul %37, %39, %cst_37 {dimension_numbers = #tpu.dot_dimension_numbers<[1], [0], [0], [1], [0, 0, 1, 1], [], []>} : vector<14x128xf32>, vector<128x128xf32>, vector<14x128xf32> -> vector<14x128xf32>
    %41 = arith.addf %36, %40 : vector<14x128xf32>
    %c0_38 = arith.constant 0 : index
    %c0_39 = arith.constant 0 : index
    %c0_40 = arith.constant 0 : index
    %c0_41 = arith.constant 0 : index
    %42 = vector.load %arg5[%c0_38, %c0_39, %c0_40, %c0_41] : memref<1x1x16x128xf32, #tpu.memory_space<vmem>>, vector<1x1x16x128xf32>
    %43 = vector.shape_cast %42 : vector<1x1x16x128xf32> to vector<16x128xf32>
    %44 = vector.extract_strided_slice %43 {offsets = [0, 0], sizes = [14, 128], strides = [1, 1]} : vector<16x128xf32> to vector<14x128xf32>
    %c2_42 = arith.constant 2 : index
    %c0_43 = arith.constant 0 : index
    %c0_44 = arith.constant 0 : index
    %c0_45 = arith.constant 0 : index
    %45 = vector.load %arg6[%c2_42, %c0_43, %c0_44, %c0_45] : memref<3x3x128x128xf32, #tpu.memory_space<vmem>>, vector<1x1x128x128xf32>
    %46 = vector.shape_cast %45 : vector<1x1x128x128xf32> to vector<128x128xf32>
    %cst_46 = arith.constant dense<0.000000e+00> : vector<14x128xf32>
    %47 = tpu.matmul %44, %46, %cst_46 {dimension_numbers = #tpu.dot_dimension_numbers<[1], [0], [0], [1], [0, 0, 1, 1], [], []>} : vector<14x128xf32>, vector<128x128xf32>, vector<14x128xf32> -> vector<14x128xf32>
    %48 = arith.addf %41, %47 : vector<14x128xf32>
    %49 = vector.extract_strided_slice %43 {offsets = [1, 0], sizes = [14, 128], strides = [1, 1]} : vector<16x128xf32> to vector<14x128xf32>
    %c2_47 = arith.constant 2 : index
    %c1_48 = arith.constant 1 : index
    %c0_49 = arith.constant 0 : index
    %c0_50 = arith.constant 0 : index
    %50 = vector.load %arg6[%c2_47, %c1_48, %c0_49, %c0_50] : memref<3x3x128x128xf32, #tpu.memory_space<vmem>>, vector<1x1x128x128xf32>
    %51 = vector.shape_cast %50 : vector<1x1x128x128xf32> to vector<128x128xf32>
    %cst_51 = arith.constant dense<0.000000e+00> : vector<14x128xf32>
    %52 = tpu.matmul %49, %51, %cst_51 {dimension_numbers = #tpu.dot_dimension_numbers<[1], [0], [0], [1], [0, 0, 1, 1], [], []>} : vector<14x128xf32>, vector<128x128xf32>, vector<14x128xf32> -> vector<14x128xf32>
    %53 = arith.addf %48, %52 : vector<14x128xf32>
    %54 = vector.extract_strided_slice %43 {offsets = [2, 0], sizes = [14, 128], strides = [1, 1]} : vector<16x128xf32> to vector<14x128xf32>
    %c2_52 = arith.constant 2 : index
    %c2_53 = arith.constant 2 : index
    %c0_54 = arith.constant 0 : index
    %c0_55 = arith.constant 0 : index
    %55 = vector.load %arg6[%c2_52, %c2_53, %c0_54, %c0_55] : memref<3x3x128x128xf32, #tpu.memory_space<vmem>>, vector<1x1x128x128xf32>
    %56 = vector.shape_cast %55 : vector<1x1x128x128xf32> to vector<128x128xf32>
    %cst_56 = arith.constant dense<0.000000e+00> : vector<14x128xf32>
    %57 = tpu.matmul %54, %56, %cst_56 {dimension_numbers = #tpu.dot_dimension_numbers<[1], [0], [0], [1], [0, 0, 1, 1], [], []>} : vector<14x128xf32>, vector<128x128xf32>, vector<14x128xf32> -> vector<14x128xf32>
    %58 = arith.addf %53, %57 : vector<14x128xf32>
    %c0_57 = arith.constant 0 : index
    %c0_58 = arith.constant 0 : index
    %59 = vector.load %arg7[%c0_57, %c0_58] : memref<1x128xf32, #tpu.memory_space<vmem>>, vector<1x128xf32>
    %60 = vector.broadcast %59 : vector<1x128xf32> to vector<14x128xf32>
    %61 = arith.addf %58, %60 : vector<14x128xf32>
    %c0_i32_59 = arith.constant 0 : i32
    %62 = arith.cmpi eq, %arg0, %c0_i32_59 : i32
    %63 = arith.extui %62 : i1 to i32
    %c0_i32_60 = arith.constant 0 : i32
    %64 = arith.cmpi ne, %63, %c0_i32_60 : i32
    scf.if %64 {
      %c0_62 = arith.constant 0 : index
      %c0_63 = arith.constant 0 : index
      %68 = vector.load %arg11[%c0_62, %c0_63] : memref<1x128xf32, #tpu.memory_space<vmem>>, vector<1x128xf32>
      %cst_64 = arith.constant dense<0.000000e+00> : vector<128xf32>
      %69 = vector.multi_reduction <add>, %61, %cst_64 [0] : vector<14x128xf32> to vector<128xf32>
      %70 = vector.shape_cast %69 : vector<128xf32> to vector<1x128xf32>
      %71 = arith.addf %68, %70 : vector<1x128xf32>
      %c0_65 = arith.constant 0 : index
      %c0_66 = arith.constant 0 : index
      %72 = vector.load %arg11[%c0_65, %c0_66] : memref<1x128xf32, #tpu.memory_space<vmem>>, vector<1x128xf32>
      tpu.vector_store %arg11[%c0_65, %c0_66], %71 {strides = array<i32>} : memref<1x128xf32, #tpu.memory_space<vmem>>, vector<1x128xf32>,
      %c0_67 = arith.constant 0 : index
      %c0_68 = arith.constant 0 : index
      %73 = vector.load %arg12[%c0_67, %c0_68] : memref<1x128xf32, #tpu.memory_space<vmem>>, vector<1x128xf32>
      %74 = arith.mulf %61, %61 : vector<14x128xf32>
      %cst_69 = arith.constant dense<0.000000e+00> : vector<128xf32>
      %75 = vector.multi_reduction <add>, %74, %cst_69 [0] : vector<14x128xf32> to vector<128xf32>
      %76 = vector.shape_cast %75 : vector<128xf32> to vector<1x128xf32>
      %77 = arith.addf %73, %76 : vector<1x128xf32>
      %c0_70 = arith.constant 0 : index
      %c0_71 = arith.constant 0 : index
      %78 = vector.load %arg12[%c0_70, %c0_71] : memref<1x128xf32, #tpu.memory_space<vmem>>, vector<1x128xf32>
      tpu.vector_store %arg12[%c0_70, %c0_71], %77 {strides = array<i32>} : memref<1x128xf32, #tpu.memory_space<vmem>>, vector<1x128xf32>,
    } else {
    }
    %c1_i32 = arith.constant 1 : i32
    %65 = arith.cmpi eq, %arg0, %c1_i32 : i32
    %66 = arith.extui %65 : i1 to i32
    %c0_i32_61 = arith.constant 0 : i32
    %67 = arith.cmpi ne, %66, %c0_i32_61 : i32
    scf.if %67 {
      %c0_62 = arith.constant 0 : index
      %c0_63 = arith.constant 0 : index
      %68 = vector.load %arg11[%c0_62, %c0_63] : memref<1x128xf32, #tpu.memory_space<vmem>>, vector<1x128xf32>
      %cst_64 = arith.constant 0.00255102036 : f32
      %69 = vector.broadcast %cst_64 : f32 to vector<1x128xf32>
      %70 = arith.mulf %68, %69 : vector<1x128xf32>
      %c0_65 = arith.constant 0 : index
      %c0_66 = arith.constant 0 : index
      %71 = vector.load %arg12[%c0_65, %c0_66] : memref<1x128xf32, #tpu.memory_space<vmem>>, vector<1x128xf32>
      %cst_67 = arith.constant 0.00255102036 : f32
      %72 = vector.broadcast %cst_67 : f32 to vector<1x128xf32>
      %73 = arith.mulf %71, %72 : vector<1x128xf32>
      %74 = arith.mulf %70, %70 : vector<1x128xf32>
      %75 = arith.subf %73, %74 : vector<1x128xf32>
      %cst_68 = arith.constant 0.000000e+00 : f32
      %76 = vector.broadcast %cst_68 : f32 to vector<1x128xf32>
      %77 = arith.maximumf %75, %76 : vector<1x128xf32>
      %cst_69 = arith.constant 9.99999974E-6 : f32
      %78 = vector.broadcast %cst_69 : f32 to vector<1x128xf32>
      %79 = arith.addf %77, %78 : vector<1x128xf32>
      %80 = math.rsqrt %79 : vector<1x128xf32>
      %c0_70 = arith.constant 0 : index
      %c0_71 = arith.constant 0 : index
      %81 = vector.load %arg8[%c0_70, %c0_71] : memref<1x128xf32, #tpu.memory_space<vmem>>, vector<1x128xf32>
      %82 = vector.broadcast %70 : vector<1x128xf32> to vector<14x128xf32>
      %83 = arith.subf %61, %82 : vector<14x128xf32>
      %84 = vector.broadcast %80 : vector<1x128xf32> to vector<14x128xf32>
      %85 = arith.mulf %83, %84 : vector<14x128xf32>
      %86 = vector.broadcast %81 : vector<1x128xf32> to vector<14x128xf32>
      %87 = arith.mulf %86, %85 : vector<14x128xf32>
      %c0_72 = arith.constant 0 : index
      %c0_73 = arith.constant 0 : index
      %88 = vector.load %arg9[%c0_72, %c0_73] : memref<1x128xf32, #tpu.memory_space<vmem>>, vector<1x128xf32>
      %89 = vector.broadcast %88 : vector<1x128xf32> to vector<14x128xf32>
      %90 = arith.addf %87, %89 : vector<14x128xf32>
      %cst_74 = arith.constant 0.000000e+00 : f32
      %91 = vector.broadcast %cst_74 : f32 to vector<14x128xf32>
      %92 = arith.maximumf %90, %91 : vector<14x128xf32>
      %93 = vector.shape_cast %92 : vector<14x128xf32> to vector<1x1x14x128xf32>
      %c0_75 = arith.constant 0 : index
      %c0_76 = arith.constant 0 : index
      %c0_77 = arith.constant 0 : index
      %c0_78 = arith.constant 0 : index
      %94 = vector.load %arg10[%c0_75, %c0_76, %c0_77, %c0_78] : memref<1x1x14x128xf32, #tpu.memory_space<vmem>>, vector<1x1x14x128xf32>
      tpu.vector_store %arg10[%c0_75, %c0_76, %c0_77, %c0_78], %93 {strides = array<i32>} : memref<1x1x14x128xf32, #tpu.memory_space<vmem>>, vector<1x1x14x128xf32>,
    } else {
    }
    return
  }
  func.func @transform_0(%arg0: i32, %arg1: i32, %arg2: i32) -> (i32, i32, i32, i32) {
    %c0_i32 = arith.constant 0 : i32
    %0 = arith.addi %arg2, %c0_i32 : i32
    %c0_i32_0 = arith.constant 0 : i32
    %c0_i32_1 = arith.constant 0 : i32
    %c0_i32_2 = arith.constant 0 : i32
    return %arg1, %0, %c0_i32_0, %c0_i32_1 : i32, i32, i32, i32
  }
  func.func @transform_1(%arg0: i32, %arg1: i32, %arg2: i32) -> (i32, i32, i32, i32) {
    %c1_i32 = arith.constant 1 : i32
    %0 = arith.addi %arg2, %c1_i32 : i32
    %c0_i32 = arith.constant 0 : i32
    %c0_i32_0 = arith.constant 0 : i32
    %c0_i32_1 = arith.constant 0 : i32
    return %arg1, %0, %c0_i32, %c0_i32_0 : i32, i32, i32, i32
  }
  func.func @transform_2(%arg0: i32, %arg1: i32, %arg2: i32) -> (i32, i32, i32, i32) {
    %c2_i32 = arith.constant 2 : i32
    %0 = arith.addi %arg2, %c2_i32 : i32
    %c0_i32 = arith.constant 0 : i32
    %c0_i32_0 = arith.constant 0 : i32
    %c0_i32_1 = arith.constant 0 : i32
    return %arg1, %0, %c0_i32, %c0_i32_0 : i32, i32, i32, i32
  }
  func.func @transform_3(%arg0: i32, %arg1: i32, %arg2: i32) -> (i32, i32, i32, i32) {
    %c0_i32 = arith.constant 0 : i32
    %c0_i32_0 = arith.constant 0 : i32
    %c0_i32_1 = arith.constant 0 : i32
    %c0_i32_2 = arith.constant 0 : i32
    %c0_i32_3 = arith.constant 0 : i32
    return %c0_i32, %c0_i32_0, %c0_i32_1, %c0_i32_2 : i32, i32, i32, i32
  }
  func.func @transform_4(%arg0: i32, %arg1: i32, %arg2: i32) -> (i32, i32) {
    %c0_i32 = arith.constant 0 : i32
    %c0_i32_0 = arith.constant 0 : i32
    %c0_i32_1 = arith.constant 0 : i32
    return %c0_i32, %c0_i32_0 : i32, i32
  }
  func.func @transform_5(%arg0: i32, %arg1: i32, %arg2: i32) -> (i32, i32) {
    %c0_i32 = arith.constant 0 : i32
    %c0_i32_0 = arith.constant 0 : i32
    %c0_i32_1 = arith.constant 0 : i32
    return %c0_i32, %c0_i32_0 : i32, i32
  }
  func.func @transform_6(%arg0: i32, %arg1: i32, %arg2: i32) -> (i32, i32) {
    %c0_i32 = arith.constant 0 : i32
    %c0_i32_0 = arith.constant 0 : i32
    %c0_i32_1 = arith.constant 0 : i32
    return %c0_i32, %c0_i32_0 : i32, i32
  }
  func.func @transform_7(%arg0: i32, %arg1: i32, %arg2: i32) -> (i32, i32, i32, i32) {
    %c0_i32 = arith.constant 0 : i32
    %c0_i32_0 = arith.constant 0 : i32
    %c0_i32_1 = arith.constant 0 : i32
    return %arg1, %arg2, %c0_i32, %c0_i32_0 : i32, i32, i32, i32
  }
}

</mosaic_0001>

<llo_original>
// kernel: tpu_custom_call.1
$region0: #{tpu_custom_call.1}
  #allocation0 [shape = 'u32[]', space=smem, size = 0x4, offset = 0x4, fixed_abs, tag = 'smem constant byte address 0x4 - core index']
  #allocation1 [shape = 'u32[144,128]{1,0:T(1,128)}', space=vmem, size = 0x12000, scoped, tag = 'internal scratch']
  #allocation2 [shape = 'f32[1,128]{1,0:T(1,128)}', space=vmem, size = 0x200, scoped, tag = 'scratch operand']
  #allocation3 [shape = 'f32[1,128]{1,0:T(1,128)}', space=vmem, size = 0x200, scoped, tag = 'scratch operand']
  %s0 = inlined_call_operand.hbm [shape: f32[2,16,16,128], index: 0, kind: input, shape index: {}]
  %s1 = inlined_call_operand.hbm [shape: f32[2,16,16,128], index: 1, kind: input, shape index: {}]
  %s2 = inlined_call_operand.hbm [shape: f32[2,16,16,128], index: 2, kind: input, shape index: {}]
  %s3 = inlined_call_operand.hbm [shape: f32[3,3,128,128], index: 3, kind: input, shape index: {}]
  %s4 = inlined_call_operand.vmem [shape: f32[1,128], index: 4, kind: input, shape index: {}]
  %s5 = inlined_call_operand.vmem [shape: f32[1,128], index: 5, kind: input, shape index: {}]
  %s6 = inlined_call_operand.vmem [shape: f32[1,128], index: 6, kind: input, shape index: {}]
  %s7 = inlined_call_operand.vmem [shape: f32[2,14,14,128], index: 7, kind: output, shape index: {}]
  %s8 = sld [smem:[#allocation0]]
  $region89: #{tpu_custom_call.1} parent=0
    _
  %s10 = ssub.s32 1, %s8
  %s11 = scalar_select 0, %s10, %s8
  $region1: #{tpu_custom_call.1} parent=0
    #allocation4 [shape = 'u8[16384]{0}', space=vmem, size = 0x4000, scoped, tag = 'input window, operand 0']
    #allocation5 [shape = 's32[2]{0}', space=sflag, size = 0x8, scoped, tag = 'scoped memory for tpu_custom_call.1']
    #allocation6 [shape = 'u8[16384]{0}', space=vmem, size = 0x4000, scoped, tag = 'input window, operand 1']
    #allocation7 [shape = 's32[2]{0}', space=sflag, size = 0x8, scoped, tag = 'scoped memory for tpu_custom_call.1']
    #allocation8 [shape = 'u8[16384]{0}', space=vmem, size = 0x4000, scoped, tag = 'input window, operand 2']
    #allocation9 [shape = 'u8[589824]{0}', space=vmem, size = 0x90000, scoped, tag = 'input window, operand 3, single buffered']
    #allocation10 [shape = 's32[1]{0}', space=sflag, size = 0x4, scoped, tag = 'scoped memory for tpu_custom_call.1']
    %12 = vsyncpa [#allocation5], 0
    %s13 = scalar_lea.sflag [#allocation5], 1
    %14 = vsyncpa %s13, 0
    %15 = vsyncpa [#allocation7], 0
    %s16 = scalar_lea.sflag [#allocation7], 1
    %17 = vsyncpa %s16, 0
    %18 = vsyncpa [#allocation10], 0
    loop: start=0, step=1, limit=58
    $region2: #{tpu_custom_call.1} parent=1 // loop_pre_header
      _
    $region3: #{tpu_custom_call.1} parent=1 // loop_header
      %s20 = sphi 0, %s24
      %p21 = scmp.ge.s32.totalorder %s20, 58
      %s27 = sphi 0, %s46
      %s28 = sphi 0, %s42
      %s29 = sphi 0, %s38
      %s30 = sphi 0, %s27
      %s31 = sphi 0, %s28
      %s32 = sphi 0, %s29
      %s33 = sphi 0, %s30
      %s34 = sphi 0, %s31
      %s35 = sphi 0, %s32
      %s51 = sphi 0, %s53
      %s54 = sphi 0, %s51
      %s55 = sphi 0, %s54
      %s71 = sphi 0, %s55
      %s81 = sphi 0, %s83
      %s84 = sphi 0, %s81
      %s85 = sphi 0, %s84
      %s101 = sphi 0, %s85
      %s111 = sphi 0, %s113
      %s114 = sphi 0, %s111
      %s115 = sphi 0, %s114
      %s131 = sphi 0, %s115
      %s135 = sphi 0, %s135
      %s137 = sphi 0, %s135
      %s138 = sphi 0, %s137
      %s152 = sphi 0, %s138
      %s156 = sphi 0, %s156
      %s158 = sphi 0, %s156
      %s159 = sphi 0, %s158
      %s173 = sphi 0, %s159
      %s177 = sphi 0, %s177
      %s179 = sphi 0, %s177
      %s180 = sphi 0, %s179
      %s194 = sphi 0, %s180
      %s198 = sphi 0, %s198
      %s200 = sphi 0, %s198
      %s201 = sphi 0, %s200
      %s215 = sphi 0, %s201
      %s223 = sphi 0, %s225
      %s226 = sphi 0, %s223
      %s227 = sphi 0, %s226
      %s243 = sphi 0, %s227
    $region4: #{tpu_custom_call.1} parent=1 // loop_header_branch
      %23 = sbr.rel (%p21) target = $region8
    $region5: #{tpu_custom_call.1} parent=1 // loop_body
      %s25 = ssub.s32 %s20, 1
      %s26 = ssub.s32 %s20, 2
      %s36 = sadd.s32 1, %s29
      %p37 = scmp.ge.s32.totalorder %s36, 14
      %s38 = scalar_select %p37, 0, %s36
      %s39 = sadd.s32 1, %s28
      %s40 = scalar_select %p37, %s39, %s28
      %p41 = scmp.ge.s32.totalorder %s40, 2
      %s42 = scalar_select %p41, 0, %s40
      %s43 = sadd.s32 1, %s27
      %s44 = scalar_select %p41, %s43, %s27
      %p45 = scmp.ge.s32.totalorder %s44, 2
      %s46 = scalar_select %p45, 0, %s44
      %s47 = ssub.s32 %s28, %s42
      %s48 = ssub.s32 %s29, %s38
      %s49 = sor.u32 %s47, %s48
      %p50 = scmp.eq.s32.totalorder %s49, 0
      %s52 = sadd.s32 %s51, 1
      %s53 = scalar_select %p50, %s51, %s52
      %p56 = pneg %p50
      %p57 = scmp.eq.s32.totalorder %s20, 55
      %p58 = por %p56, %p57
      %p59 = scmp.ne.s32.totalorder %s51, %s54
      %p60 = scmp.eq.s32.totalorder %s20, 0
      %p61 = por %p59, %p60
      %p62 = scmp.ne.s32.totalorder %s51, %s54
      %p63 = scmp.eq.s32.totalorder %s25, 55
      %p64 = por %p62, %p63
      %p65 = scmp.ne.s32.totalorder %s54, %s55
      %p66 = scmp.eq.s32.totalorder %s25, 0
      %p67 = por %p65, %p66
      %p68 = scmp.ne.s32.totalorder %s54, %s55
      %p69 = scmp.eq.s32.totalorder %s26, 55
      %p70 = por %p68, %p69
      %p72 = scmp.ne.s32.totalorder %s55, %s71
      %p73 = scmp.eq.s32.totalorder %s26, 0
      %p74 = por %p72, %p73
      %s75 = sadd.s32 %s29, 1
      %s76 = sadd.s32 %s38, 1
      %s77 = ssub.s32 %s28, %s42
      %s78 = ssub.s32 %s75, %s76
      %s79 = sor.u32 %s77, %s78
      %p80 = scmp.eq.s32.totalorder %s79, 0
      %s82 = sadd.s32 %s81, 1
      %s83 = scalar_select %p80, %s81, %s82
      %p86 = pneg %p80
      %p87 = scmp.eq.s32.totalorder %s20, 55
      %p88 = por %p86, %p87
      %p89 = scmp.ne.s32.totalorder %s81, %s84
      %p90 = scmp.eq.s32.totalorder %s20, 0
      %p91 = por %p89, %p90
      %p92 = scmp.ne.s32.totalorder %s81, %s84
      %p93 = scmp.eq.s32.totalorder %s25, 55
      %p94 = por %p92, %p93
      %p95 = scmp.ne.s32.totalorder %s84, %s85
      %p96 = scmp.eq.s32.totalorder %s25, 0
      %p97 = por %p95, %p96
      %p98 = scmp.ne.s32.totalorder %s84, %s85
      %p99 = scmp.eq.s32.totalorder %s26, 55
      %p100 = por %p98, %p99
      %p102 = scmp.ne.s32.totalorder %s85, %s101
      %p103 = scmp.eq.s32.totalorder %s26, 0
      %p104 = por %p102, %p103
      %s105 = sadd.s32 %s29, 2
      %s106 = sadd.s32 %s38, 2
      %s107 = ssub.s32 %s28, %s42
      %s108 = ssub.s32 %s105, %s106
      %s109 = sor.u32 %s107, %s108
      %p110 = scmp.eq.s32.totalorder %s109, 0
      %s112 = sadd.s32 %s111, 1
      %s113 = scalar_select %p110, %s111, %s112
      %p116 = pneg %p110
      %p117 = scmp.eq.s32.totalorder %s20, 55
      %p118 = por %p116, %p117
      %p119 = scmp.ne.s32.totalorder %s111, %s114
      %p120 = scmp.eq.s32.totalorder %s20, 0
      %p121 = por %p119, %p120
      %p122 = scmp.ne.s32.totalorder %s111, %s114
      %p123 = scmp.eq.s32.totalorder %s25, 55
      %p124 = por %p122, %p123
      %p125 = scmp.ne.s32.totalorder %s114, %s115
      %p126 = scmp.eq.s32.totalorder %s25, 0
      %p127 = por %p125, %p126
      %p128 = scmp.ne.s32.totalorder %s114, %s115
      %p129 = scmp.eq.s32.totalorder %s26, 55
      %p130 = por %p128, %p129
      %p132 = scmp.ne.s32.totalorder %s115, %s131
      %p133 = scmp.eq.s32.totalorder %s26, 0
      %p134 = por %p132, %p133
      %s136 = sadd.s32 %s135, 1
      %p139 = scmp.eq.s32.totalorder %s20, 55
      %p140 = scmp.ne.s32.totalorder %s135, %s137
      %p141 = scmp.eq.s32.totalorder %s20, 0
      %p142 = por %p140, %p141
      %p143 = scmp.ne.s32.totalorder %s135, %s137
      %p144 = scmp.eq.s32.totalorder %s25, 55
      %p145 = por %p143, %p144
      %p146 = scmp.ne.s32.totalorder %s137, %s138
      %p147 = scmp.eq.s32.totalorder %s25, 0
      %p148 = por %p146, %p147
      %p149 = scmp.ne.s32.totalorder %s137, %s138
      %p150 = scmp.eq.s32.totalorder %s26, 55
      %p151 = por %p149, %p150
      %p153 = scmp.ne.s32.totalorder %s138, %s152
      %p154 = scmp.eq.s32.totalorder %s26, 0
      %p155 = por %p153, %p154
      %s157 = sadd.s32 %s156, 1
      %p160 = scmp.eq.s32.totalorder %s20, 55
      %p161 = scmp.ne.s32.totalorder %s156, %s158
      %p162 = scmp.eq.s32.totalorder %s20, 0
      %p163 = por %p161, %p162
      %p164 = scmp.ne.s32.totalorder %s156, %s158
      %p165 = scmp.eq.s32.totalorder %s25, 55
      %p166 = por %p164, %p165
      %p167 = scmp.ne.s32.totalorder %s158, %s159
      %p168 = scmp.eq.s32.totalorder %s25, 0
      %p169 = por %p167, %p168
      %p170 = scmp.ne.s32.totalorder %s158, %s159
      %p171 = scmp.eq.s32.totalorder %s26, 55
      %p172 = por %p170, %p171
      %p174 = scmp.ne.s32.totalorder %s159, %s173
      %p175 = scmp.eq.s32.totalorder %s26, 0
      %p176 = por %p174, %p175
      %s178 = sadd.s32 %s177, 1
      %p181 = scmp.eq.s32.totalorder %s20, 55
      %p182 = scmp.ne.s32.totalorder %s177, %s179
      %p183 = scmp.eq.s32.totalorder %s20, 0
      %p184 = por %p182, %p183
      %p185 = scmp.ne.s32.totalorder %s177, %s179
      %p186 = scmp.eq.s32.totalorder %s25, 55
      %p187 = por %p185, %p186
      %p188 = scmp.ne.s32.totalorder %s179, %s180
      %p189 = scmp.eq.s32.totalorder %s25, 0
      %p190 = por %p188, %p189
      %p191 = scmp.ne.s32.totalorder %s179, %s180
      %p192 = scmp.eq.s32.totalorder %s26, 55
      %p193 = por %p191, %p192
      %p195 = scmp.ne.s32.totalorder %s180, %s194
      %p196 = scmp.eq.s32.totalorder %s26, 0
      %p197 = por %p195, %p196
      %s199 = sadd.s32 %s198, 1
      %p202 = scmp.eq.s32.totalorder %s20, 55
      %p203 = scmp.ne.s32.totalorder %s198, %s200
      %p204 = scmp.eq.s32.totalorder %s20, 0
      %p205 = por %p203, %p204
      %p206 = scmp.ne.s32.totalorder %s198, %s200
      %p207 = scmp.eq.s32.totalorder %s25, 55
      %p208 = por %p206, %p207
      %p209 = scmp.ne.s32.totalorder %s200, %s201
      %p210 = scmp.eq.s32.totalorder %s25, 0
      %p211 = por %p209, %p210
      %p212 = scmp.ne.s32.totalorder %s200, %s201
      %p213 = scmp.eq.s32.totalorder %s26, 55
      %p214 = por %p212, %p213
      %p216 = scmp.ne.s32.totalorder %s201, %s215
      %p217 = scmp.eq.s32.totalorder %s26, 0
      %p218 = por %p216, %p217
      %s219 = ssub.s32 %s28, %s42
      %s220 = ssub.s32 %s29, %s38
      %s221 = sor.u32 %s219, %s220
      %p222 = scmp.eq.s32.totalorder %s221, 0
      %s224 = sadd.s32 %s223, 1
      %s225 = scalar_select %p222, %s223, %s224
      %p228 = pneg %p222
      %p229 = scmp.eq.s32.totalorder %s20, 55
      %p230 = por %p228, %p229
      %p231 = scmp.ne.s32.totalorder %s223, %s226
      %p232 = scmp.eq.s32.totalorder %s20, 0
      %p233 = por %p231, %p232
      %p234 = scmp.ne.s32.totalorder %s223, %s226
      %p235 = scmp.eq.s32.totalorder %s25, 55
      %p236 = por %p234, %p235
      %p237 = scmp.ne.s32.totalorder %s226, %s227
      %p238 = scmp.eq.s32.totalorder %s25, 0
      %p239 = por %p237, %p238
      %p240 = scmp.ne.s32.totalorder %s226, %s227
      %p241 = scmp.eq.s32.totalorder %s26, 55
      %p242 = por %p240, %p241
      %p244 = scmp.ne.s32.totalorder %s227, %s243
      %p245 = scmp.eq.s32.totalorder %s26, 0
      %p246 = por %p244, %p245
      %p247 = scmp.le.s32.totalorder 1, %s20
      %p248 = scmp.lt.s32.totalorder %s20, 57
      %p249 = pnand %p247, %p248
      %p250 = pneg %p249
      // Predicated region
      $region9: #{tpu_custom_call.1} parent=5 // pred_check
        _
      $region10: #{tpu_custom_call.1} parent=5 // pred_check_branch
        %252 = sbr.rel (%p249) target = $region12
      $region11: #{tpu_custom_call.1} parent=5 // pred_region
        %s253 = ssub.s32 %s20, 1
        // Predicated region
        $region13: #{tpu_custom_call.1} parent=11 // pred_check
          %p254 = pneg %p148
        $region14: #{tpu_custom_call.1} parent=11 // pred_check_branch
          %256 = sbr.rel (%p254) target = $region16
        $region15: #{tpu_custom_call.1} parent=11 // pred_region
          %s258 = ssub.s32 18432, 18432
          %259 = vsyncadd [#allocation10], %s258
          %s260 = sshll.u32 [#allocation9], 4
          %s261 = int_to_ptr.vmem [resolvable:$true] %s260
          %266 = dma.hbm_to_vmem [thread:$0]  %s3, 18432, %s261, [#allocation10], 128, 128, 8
        $region16: #{tpu_custom_call.1} parent=11 // pred_fallthru
          _
        // Predicated region
        $region17: #{tpu_custom_call.1} parent=11 // pred_check
          %p267 = pneg %p169
        $region18: #{tpu_custom_call.1} parent=11 // pred_check_branch
          %269 = sbr.rel (%p267) target = $region20
        $region19: #{tpu_custom_call.1} parent=11 // pred_region
          _
        $region20: #{tpu_custom_call.1} parent=11 // pred_fallthru
          _
        // Predicated region
        $region21: #{tpu_custom_call.1} parent=11 // pred_check
          %p270 = pneg %p190
        $region22: #{tpu_custom_call.1} parent=11 // pred_check_branch
          %272 = sbr.rel (%p270) target = $region24
        $region23: #{tpu_custom_call.1} parent=11 // pred_region
          _
        $region24: #{tpu_custom_call.1} parent=11 // pred_fallthru
          _
        // Predicated region
        $region25: #{tpu_custom_call.1} parent=11 // pred_check
          %p273 = pneg %p211
        $region26: #{tpu_custom_call.1} parent=11 // pred_check_branch
          %275 = sbr.rel (%p273) target = $region28
        $region27: #{tpu_custom_call.1} parent=11 // pred_region
          _
        $region28: #{tpu_custom_call.1} parent=11 // pred_fallthru
          _
      $region12: #{tpu_custom_call.1} parent=5 // pred_fallthru
        _
      %p276 = scmp.lt.s32.totalorder %s20, 56
      // Predicated region
      $region29: #{tpu_custom_call.1} parent=5 // pred_check
        %p277 = pneg %p276
      $region30: #{tpu_custom_call.1} parent=5 // pred_check_branch
        %279 = sbr.rel (%p277) target = $region32
      $region31: #{tpu_custom_call.1} parent=5 // pred_region
        // Predicated region
        $region33: #{tpu_custom_call.1} parent=31 // pred_check
          %p280 = pneg %p61
        $region34: #{tpu_custom_call.1} parent=31 // pred_check_branch
          %282 = sbr.rel (%p280) target = $region36
        $region35: #{tpu_custom_call.1} parent=31 // pred_region
          %s283 = sand.u32 %s51, 1
          %s284 = scalar_lea.sflag [#allocation5], %s283
          %s285 = sand.u32 %s51, 1
          %s286 = smul.addr %s285, 16
          %s287 = scalar_lea.vmem [#allocation4], %s286
          %s289 = ssub.s32 256, 256
          %290 = vsyncadd %s284, %s289
          %s291 = smul.addr %s29, 2
          %s292 = smul.addr %s28, 32
          %s293 = sadd.s32 %s291, %s292
          %s294 = smul.addr %s293, 128
          %s295 = scalar_lea.hbm %s0, %s294
          %s296 = sshll.u32 %s287, 4
          %s297 = int_to_ptr.vmem [resolvable:$true] %s296
          %302 = dma.hbm_to_vmem [thread:$0]  %s295, 256, %s297, %s284, 128, 128, 8
        $region36: #{tpu_custom_call.1} parent=31 // pred_fallthru
          _
        // Predicated region
        $region37: #{tpu_custom_call.1} parent=31 // pred_check
          %p303 = pneg %p91
        $region38: #{tpu_custom_call.1} parent=31 // pred_check_branch
          %305 = sbr.rel (%p303) target = $region40
        $region39: #{tpu_custom_call.1} parent=31 // pred_region
          %s306 = sand.u32 %s20, 1
          %s307 = scalar_lea.sflag [#allocation7], %s306
          %s308 = sand.u32 %s81, 1
          %s309 = smul.addr %s308, 16
          %s310 = scalar_lea.vmem [#allocation6], %s309
          %s311 = sadd.s32 %s29, 1
          %s313 = ssub.s32 256, 256
          %314 = vsyncadd %s307, %s313
          %s315 = smul.addr %s311, 2
          %s316 = smul.addr %s28, 32
          %s317 = sadd.s32 %s315, %s316
          %s318 = smul.addr %s317, 128
          %s319 = scalar_lea.hbm %s1, %s318
          %s320 = sshll.u32 %s310, 4
          %s321 = int_to_ptr.vmem [resolvable:$true] %s320
          %326 = dma.hbm_to_vmem [thread:$0]  %s319, 256, %s321, %s307, 128, 128, 8
        $region40: #{tpu_custom_call.1} parent=31 // pred_fallthru
          _
        // Predicated region
        $region41: #{tpu_custom_call.1} parent=31 // pred_check
          %p327 = pneg %p121
        $region42: #{tpu_custom_call.1} parent=31 // pred_check_branch
          %329 = sbr.rel (%p327) target = $region44
        $region43: #{tpu_custom_call.1} parent=31 // pred_region
          %s330 = sand.u32 %s20, 1
          %s331 = scalar_lea.sflag [#allocation7], %s330
          %s332 = sand.u32 %s111, 1
          %s333 = smul.addr %s332, 16
          %s334 = scalar_lea.vmem [#allocation8], %s333
          %s335 = sadd.s32 %s29, 2
          %s337 = ssub.s32 256, 256
          %338 = vsyncadd %s331, %s337
          %s339 = smul.addr %s335, 2
          %s340 = smul.addr %s28, 32
          %s341 = sadd.s32 %s339, %s340
          %s342 = smul.addr %s341, 128
          %s343 = scalar_lea.hbm %s2, %s342
          %s344 = sshll.u32 %s334, 4
          %s345 = int_to_ptr.vmem [resolvable:$true] %s344
          %350 = dma.hbm_to_vmem [thread:$0]  %s343, 256, %s345, %s331, 128, 128, 8
        $region44: #{tpu_custom_call.1} parent=31 // pred_fallthru
          _
      $region32: #{tpu_custom_call.1} parent=5 // pred_fallthru
        _
      %p351 = scmp.le.s32.totalorder 1, %s20
      %p352 = scmp.lt.s32.totalorder %s20, 57
      %p353 = pnand %p351, %p352
      %p354 = pneg %p353
      // Predicated region
      $region45: #{tpu_custom_call.1} parent=5 // pred_check
        _
      $region46: #{tpu_custom_call.1} parent=5 // pred_check_branch
        %356 = sbr.rel (%p353) target = $region48
      $region47: #{tpu_custom_call.1} parent=5 // pred_region
        %s357 = ssub.s32 %s20, 1
        %s358 = sand.u32 %s54, 1
        %s359 = scalar_lea.sflag [#allocation5], %s358
        %s360 = sand.u32 %s54, 1
        %s361 = smul.addr %s360, 16
        %s362 = scalar_lea.vmem [#allocation4], %s361
        // Predicated region
        $region49: #{tpu_custom_call.1} parent=47 // pred_check
          %p363 = pneg %p67
        $region50: #{tpu_custom_call.1} parent=47 // pred_check_branch
          %365 = sbr.rel (%p363) target = $region52
        $region51: #{tpu_custom_call.1} parent=47 // pred_region
          %366 = dma.done %s359, 256
        $region52: #{tpu_custom_call.1} parent=47 // pred_fallthru
          _
        %s367 = sand.u32 %s25, 1
        %s368 = scalar_lea.sflag [#allocation7], %s367
        %s369 = sand.u32 %s84, 1
        %s370 = smul.addr %s369, 16
        %s371 = scalar_lea.vmem [#allocation6], %s370
        // Predicated region
        $region53: #{tpu_custom_call.1} parent=47 // pred_check
          %p372 = pneg %p97
        $region54: #{tpu_custom_call.1} parent=47 // pred_check_branch
          %374 = sbr.rel (%p372) target = $region56
        $region55: #{tpu_custom_call.1} parent=47 // pred_region
          %375 = dma.done %s368, 256
        $region56: #{tpu_custom_call.1} parent=47 // pred_fallthru
          _
        %s376 = sand.u32 %s25, 1
        %s377 = scalar_lea.sflag [#allocation7], %s376
        %s378 = sand.u32 %s114, 1
        %s379 = smul.addr %s378, 16
        %s380 = scalar_lea.vmem [#allocation8], %s379
        // Predicated region
        $region57: #{tpu_custom_call.1} parent=47 // pred_check
          %p381 = pneg %p127
        $region58: #{tpu_custom_call.1} parent=47 // pred_check_branch
          %383 = sbr.rel (%p381) target = $region60
        $region59: #{tpu_custom_call.1} parent=47 // pred_region
          %384 = dma.done %s377, 256
        $region60: #{tpu_custom_call.1} parent=47 // pred_fallthru
          _
        // Predicated region
        $region61: #{tpu_custom_call.1} parent=47 // pred_check
          %p385 = pneg %p148
        $region62: #{tpu_custom_call.1} parent=47 // pred_check_branch
          %387 = sbr.rel (%p385) target = $region64
        $region63: #{tpu_custom_call.1} parent=47 // pred_region
          %388 = dma.done [#allocation10], 18432
        $region64: #{tpu_custom_call.1} parent=47 // pred_fallthru
          _
        %s389 = sand.u32 %s54, 1
        %s390 = scalar_lea.sflag [#allocation5], %s389
        %s391 = sand.u32 %s54, 1
        %s392 = smul.addr %s391, 16
        %s393 = scalar_lea.vmem [#allocation4], %s392
        %p394 = pneg %p67
        %p395 = pneg %p64
        %s396 = sand.u32 %s25, 1
        %s397 = scalar_lea.sflag [#allocation7], %s396
        %s398 = sand.u32 %s84, 1
        %s399 = smul.addr %s398, 16
        %s400 = scalar_lea.vmem [#allocation6], %s399
        %p401 = pneg %p97
        %p402 = pneg %p94
        %s403 = sand.u32 %s25, 1
        %s404 = scalar_lea.sflag [#allocation7], %s403
        %s405 = sand.u32 %s114, 1
        %s406 = smul.addr %s405, 16
        %s407 = scalar_lea.vmem [#allocation8], %s406
        %p408 = pneg %p127
        %p409 = pneg %p124
        %p410 = pneg %p148
        %p411 = pneg %p145
        %p412 = pneg %p169
        %p413 = pneg %p166
        %p414 = pneg %p190
        %p415 = pneg %p187
        %p416 = pneg %p211
        %p417 = pneg %p208
        %p418 = pneg %p239
        %p419 = pneg %p236
        %p420 = scmp.lt.s32.totalorder %s31, 1
        %s421 = scalar_select %p420, %s31, 1
        %p422 = scmp.lt.s32.totalorder %s32, 13
        %s423 = scalar_select %p422, %s32, 13
        %s424 = smul.addr %s423, 2
        %s425 = smul.addr %s421, 28
        %s426 = sadd.s32 %s424, %s425
        %s427 = smul.addr %s426, 8
        %s428 = scalar_lea.vmem %s7, %s427
        %s429 = sadd.s32 %s32, 1
        %s430 = sadd.s32 %s32, 2
        %p431 = scmp.lt.s32.totalorder %s31, 1
        %s432 = scalar_select %p431, %s31, 1
        %p433 = scmp.lt.s32.totalorder %s32, 13
        %s434 = scalar_select %p433, %s32, 13
        %s435 = smul.addr %s434, 2
        %s436 = smul.addr %s432, 28
        %s437 = sadd.s32 %s435, %s436
        %s438 = smul.addr %s437, 8
        %s439 = scalar_lea.vmem %s7, %s438
        %p440 = scmp.eq.s32.totalorder %s30, 0
        %p441 = scmp.eq.s32.totalorder %s31, 0
        %p442 = pnand %p440, %p441
        %p443 = pneg %p442
        %p444 = scmp.eq.s32.totalorder %s32, 0
        %p445 = pnand %p443, %p444
        %p446 = pneg %p445
        // Predicated region
        $region65: #{tpu_custom_call.1} parent=47 // pred_check
          _
        $region66: #{tpu_custom_call.1} parent=47 // pred_check_branch
          %448 = sbr.rel (%p445) target = $region68
        $region67: #{tpu_custom_call.1} parent=47 // pred_region
          %449 = vst [vmem:[#allocation2] sm:$0x1] 0.0
          %450 = vst [vmem:[#allocation3] sm:$0x1] 0.0
        $region68: #{tpu_custom_call.1} parent=47 // pred_fallthru
          _
        %v451 = vld [vmem:[%s362] sm:$0xff]
        %v452 = vld [vmem:[%s362 + $0x8] sm:$0xff]
        %v453 = vld [vmem:[#allocation9] sm:$0xff]
        %v454 = vld [vmem:[#allocation9 + $0x8] sm:$0xff]
        %v455 = vld [vmem:[#allocation9 + $0x10] sm:$0xff]
        %v456 = vld [vmem:[#allocation9 + $0x18] sm:$0xff]
        %v457 = vld [vmem:[#allocation9 + $0x20] sm:$0xff]
        %v458 = vld [vmem:[#allocation9 + $0x28] sm:$0xff]
        %v459 = vld [vmem:[#allocation9 + $0x30] sm:$0xff]
        %v460 = vld [vmem:[#allocation9 + $0x38] sm:$0xff]
        %v461 = vld [vmem:[#allocation9 + $0x40] sm:$0xff]
        %v462 = vld [vmem:[#allocation9 + $0x48] sm:$0xff]
        %v463 = vld [vmem:[#allocation9 + $0x50] sm:$0xff]
        %v464 = vld [vmem:[#allocation9 + $0x58] sm:$0xff]
        %v465 = vld [vmem:[#allocation9 + $0x60] sm:$0xff]
        %v466 = vld [vmem:[#allocation9 + $0x68] sm:$0xff]
        %v467 = vld [vmem:[#allocation9 + $0x70] sm:$0xff]
        %v468 = vld [vmem:[#allocation9 + $0x78] sm:$0xff]
        %s469 = scalar_lea.vmem [#allocation9], 128
        %v470 = vld [vmem:[%s469] sm:$0xff]
        %v471 = vld [vmem:[%s469 + $0x8] sm:$0xff]
        %v472 = vld [vmem:[%s469 + $0x10] sm:$0xff]
        %v473 = vld [vmem:[%s469 + $0x18] sm:$0xff]
        %v474 = vld [vmem:[%s469 + $0x20] sm:$0xff]
        %v475 = vld [vmem:[%s469 + $0x28] sm:$0xff]
        %v476 = vld [vmem:[%s469 + $0x30] sm:$0xff]
        %v477 = vld [vmem:[%s469 + $0x38] sm:$0xff]
        %v478 = vld [vmem:[%s469 + $0x40] sm:$0xff]
        %v479 = vld [vmem:[%s469 + $0x48] sm:$0xff]
        %v480 = vld [vmem:[%s469 + $0x50] sm:$0xff]
        %v481 = vld [vmem:[%s469 + $0x58] sm:$0xff]
        %v482 = vld [vmem:[%s469 + $0x60] sm:$0xff]
        %v483 = vld [vmem:[%s469 + $0x68] sm:$0xff]
        %v484 = vld [vmem:[%s469 + $0x70] sm:$0xff]
        %v485 = vld [vmem:[%s469 + $0x78] sm:$0xff]
        %vm488 = vcmask 1046528
        %v489 = vrot.slane %v451, 1
        %v490 = vrot.slane %v452, 1
        %v491 = vsel %vm488, %v489, %v490
        %494 = vmatprep.subr.mxu0 0.0
        %495 = vmatpush1.msra.mxu0 %v470
        %496 = vmatprep.subr.mxu0 0.0
        %497 = vmatpush1.msra.mxu0 %v471
        %498 = vmatprep.subr.mxu0 0.0
        %499 = vmatpush1.msra.mxu0 %v472
        %500 = vmatprep.subr.mxu0 0.0
        %501 = vmatpush1.msra.mxu0 %v473
        %502 = vmatprep.subr.mxu0 0.0
        %503 = vmatpush1.msra.mxu0 %v474
        %504 = vmatprep.subr.mxu0 0.0
        %505 = vmatpush1.msra.mxu0 %v475
        %506 = vmatprep.subr.mxu0 0.0
        %507 = vmatpush1.msra.mxu0 %v476
        %508 = vmatprep.subr.mxu0 0.0
        %509 = vmatpush1.msra.mxu0 %v477
        %510 = vmatprep.subr.mxu0 0.0
        %511 = vmatpush1.msra.mxu0 %v478
        %512 = vmatprep.subr.mxu0 0.0
        %513 = vmatpush1.msra.mxu0 %v479
        %514 = vmatprep.subr.mxu0 0.0
        %515 = vmatpush1.msra.mxu0 %v480
        %516 = vmatprep.subr.mxu0 0.0
        %517 = vmatpush1.msra.mxu0 %v481
        %518 = vmatprep.subr.mxu0 0.0
        %519 = vmatpush1.msra.mxu0 %v482
        %520 = vmatprep.subr.mxu0 0.0
        %521 = vmatpush1.msra.mxu0 %v483
        %522 = vmatprep.subr.mxu0 0.0
        %523 = vmatpush1.msra.mxu0 %v484
        %524 = vmatprep.subr.mxu0 0.0
        %525 = vmatpush1.msra.mxu0 %v485
        %526 = vmatprep.subr.mxu0 0.0
        %527 = vmatpush1.msra.mxu0 0.0
        %528 = vmatprep.subr.mxu0 0.0
        %529 = vmatpush1.msra.mxu0 0.0
        %530 = vmatprep.subr.mxu0 0.0
        %531 = vmatpush1.msra.mxu0 0.0
        %532 = vmatprep.subr.mxu0 0.0
        %533 = vmatpush1.msra.mxu0 0.0
        %534 = vmatprep.subr.mxu0 0.0
        %535 = vmatpush1.msra.mxu0 0.0
        %536 = vmatprep.subr.mxu0 0.0
        %537 = vmatpush1.msra.mxu0 0.0
        %538 = vmatprep.subr.mxu0 0.0
        %539 = vmatpush1.msra.mxu0 0.0
        %540 = vmatprep.subr.mxu0 0.0
        %541 = vmatpush1.msra.mxu0 0.0
        %542 = vmatprep.subr.mxu0 0.0
        %543 = vmatpush1.msra.mxu0 0.0
        %544 = vmatprep.subr.mxu0 0.0
        %545 = vmatpush1.msra.mxu0 0.0
        %546 = vmatprep.subr.mxu0 0.0
        %547 = vmatpush1.msra.mxu0 0.0
        %548 = vmatprep.subr.mxu0 0.0
        %549 = vmatpush1.msra.mxu0 0.0
        %550 = vmatprep.subr.mxu0 0.0
        %551 = vmatpush1.msra.mxu0 0.0
        %552 = vmatprep.subr.mxu0 0.0
        %553 = vmatpush1.msra.mxu0 0.0
        %554 = vmatprep.subr.mxu0 0.0
        %555 = vmatpush1.msra.mxu0 0.0
        %556 = vmatprep.subr.mxu0 0.0
        %557 = vmatpush1.msra.mxu0 0.0
        %558 = vmatprep.mubr.f32.mxu0 0.0
        %559 = vmatmul.mubr.f32.gmra.mrb[0].mxu0 %v491
        %v560 = vpop.f32.mrb[0].mxu0
        %v561 = vadd.f32 0.0, %v560
        %v562 = vpop.f32.mrb[0].mxu0
        %563 = vmatprep.mubr.f32.mxu0 0.0
        %564 = vmatmul.mubr.f32.gmra.mrb[0].mxu0 %v490
        %v565 = vpop.f32.mrb[0].mxu0
        %v566 = vadd.f32 0.0, %v565
        %v567 = vpop.f32.mrb[0].mxu0
        %568 = vdwg.mxu0
        %569 = vmatprep.subr.mxu0 0.0
        %570 = vmatpush1.msra.mxu0 %v453
        %571 = vmatprep.subr.mxu0 0.0
        %572 = vmatpush1.msra.mxu0 %v454
        %573 = vmatprep.subr.mxu0 0.0
        %574 = vmatpush1.msra.mxu0 %v455
        %575 = vmatprep.subr.mxu0 0.0
        %576 = vmatpush1.msra.mxu0 %v456
        %577 = vmatprep.subr.mxu0 0.0
        %578 = vmatpush1.msra.mxu0 %v457
        %579 = vmatprep.subr.mxu0 0.0
        %580 = vmatpush1.msra.mxu0 %v458
        %581 = vmatprep.subr.mxu0 0.0
        %582 = vmatpush1.msra.mxu0 %v459
        %583 = vmatprep.subr.mxu0 0.0
        %584 = vmatpush1.msra.mxu0 %v460
        %585 = vmatprep.subr.mxu0 0.0
        %586 = vmatpush1.msra.mxu0 %v461
        %587 = vmatprep.subr.mxu0 0.0
        %588 = vmatpush1.msra.mxu0 %v462
        %589 = vmatprep.subr.mxu0 0.0
        %590 = vmatpush1.msra.mxu0 %v463
        %591 = vmatprep.subr.mxu0 0.0
        %592 = vmatpush1.msra.mxu0 %v464
        %593 = vmatprep.subr.mxu0 0.0
        %594 = vmatpush1.msra.mxu0 %v465
        %595 = vmatprep.subr.mxu0 0.0
        %596 = vmatpush1.msra.mxu0 %v466
        %597 = vmatprep.subr.mxu0 0.0
        %598 = vmatpush1.msra.mxu0 %v467
        %599 = vmatprep.subr.mxu0 0.0
        %600 = vmatpush1.msra.mxu0 %v468
        %601 = vmatprep.subr.mxu0 0.0
        %602 = vmatpush1.msra.mxu0 0.0
        %603 = vmatprep.subr.mxu0 0.0
        %604 = vmatpush1.msra.mxu0 0.0
        %605 = vmatprep.subr.mxu0 0.0
        %606 = vmatpush1.msra.mxu0 0.0
        %607 = vmatprep.subr.mxu0 0.0
        %608 = vmatpush1.msra.mxu0 0.0
        %609 = vmatprep.subr.mxu0 0.0
        %610 = vmatpush1.msra.mxu0 0.0
        %611 = vmatprep.subr.mxu0 0.0
        %612 = vmatpush1.msra.mxu0 0.0
        %613 = vmatprep.subr.mxu0 0.0
        %614 = vmatpush1.msra.mxu0 0.0
        %615 = vmatprep.subr.mxu0 0.0
        %616 = vmatpush1.msra.mxu0 0.0
        %617 = vmatprep.subr.mxu0 0.0
        %618 = vmatpush1.msra.mxu0 0.0
        %619 = vmatprep.subr.mxu0 0.0
        %620 = vmatpush1.msra.mxu0 0.0
        %621 = vmatprep.subr.mxu0 0.0
        %622 = vmatpush1.msra.mxu0 0.0
        %623 = vmatprep.subr.mxu0 0.0
        %624 = vmatpush1.msra.mxu0 0.0
        %625 = vmatprep.subr.mxu0 0.0
        %626 = vmatpush1.msra.mxu0 0.0
        %627 = vmatprep.subr.mxu0 0.0
        %628 = vmatpush1.msra.mxu0 0.0
        %629 = vmatprep.subr.mxu0 0.0
        %630 = vmatpush1.msra.mxu0 0.0
        %631 = vmatprep.subr.mxu0 0.0
        %632 = vmatpush1.msra.mxu0 0.0
        %633 = vmatprep.mubr.f32.mxu0 0.0
        %634 = vmatmul.mubr.f32.gmra.mrb[0].mxu0 %v451
        %v635 = vpop.f32.mrb[0].mxu0
        %v636 = vadd.f32 %v561, %v635
        %v637 = vpop.f32.mrb[0].mxu0
        %638 = vmatprep.mubr.f32.mxu0 0.0
        %639 = vmatmul.mubr.f32.gmra.mrb[0].mxu0 %v452
        %v640 = vpop.f32.mrb[0].mxu0
        %v641 = vadd.f32 %v566, %v640
        %v642 = vpop.f32.mrb[0].mxu0
        %643 = vdwg.mxu0
        %s644 = scalar_lea.vmem [#allocation9], 256
        %v645 = vld [vmem:[%s644] sm:$0xff]
        %v646 = vld [vmem:[%s644 + $0x8] sm:$0xff]
        %v647 = vld [vmem:[%s644 + $0x10] sm:$0xff]
        %v648 = vld [vmem:[%s644 + $0x18] sm:$0xff]
        %v649 = vld [vmem:[%s644 + $0x20] sm:$0xff]
        %v650 = vld [vmem:[%s644 + $0x28] sm:$0xff]
        %v651 = vld [vmem:[%s644 + $0x30] sm:$0xff]
        %v652 = vld [vmem:[%s644 + $0x38] sm:$0xff]
        %v653 = vld [vmem:[%s644 + $0x40] sm:$0xff]
        %v654 = vld [vmem:[%s644 + $0x48] sm:$0xff]
        %v655 = vld [vmem:[%s644 + $0x50] sm:$0xff]
        %v656 = vld [vmem:[%s644 + $0x58] sm:$0xff]
        %v657 = vld [vmem:[%s644 + $0x60] sm:$0xff]
        %v658 = vld [vmem:[%s644 + $0x68] sm:$0xff]
        %v659 = vld [vmem:[%s644 + $0x70] sm:$0xff]
        %v660 = vld [vmem:[%s644 + $0x78] sm:$0xff]
        %vm661 = vcmask 1045504
        %v662 = vrot.slane %v451, 2
        %v663 = vrot.slane %v452, 2
        %v664 = vsel %vm661, %v662, %v663
        %667 = vmatprep.subr.mxu0 0.0
        %668 = vmatpush1.msra.mxu0 %v645
        %669 = vmatprep.subr.mxu0 0.0
        %670 = vmatpush1.msra.mxu0 %v646
        %671 = vmatprep.subr.mxu0 0.0
        %672 = vmatpush1.msra.mxu0 %v647
        %673 = vmatprep.subr.mxu0 0.0
        %674 = vmatpush1.msra.mxu0 %v648
        %675 = vmatprep.subr.mxu0 0.0
        %676 = vmatpush1.msra.mxu0 %v649
        %677 = vmatprep.subr.mxu0 0.0
        %678 = vmatpush1.msra.mxu0 %v650
        %679 = vmatprep.subr.mxu0 0.0
        %680 = vmatpush1.msra.mxu0 %v651
        %681 = vmatprep.subr.mxu0 0.0
        %682 = vmatpush1.msra.mxu0 %v652
        %683 = vmatprep.subr.mxu0 0.0
        %684 = vmatpush1.msra.mxu0 %v653
        %685 = vmatprep.subr.mxu0 0.0
        %686 = vmatpush1.msra.mxu0 %v654
        %687 = vmatprep.subr.mxu0 0.0
        %688 = vmatpush1.msra.mxu0 %v655
        %689 = vmatprep.subr.mxu0 0.0
        %690 = vmatpush1.msra.mxu0 %v656
        %691 = vmatprep.subr.mxu0 0.0
        %692 = vmatpush1.msra.mxu0 %v657
        %693 = vmatprep.subr.mxu0 0.0
        %694 = vmatpush1.msra.mxu0 %v658
        %695 = vmatprep.subr.mxu0 0.0
        %696 = vmatpush1.msra.mxu0 %v659
        %697 = vmatprep.subr.mxu0 0.0
        %698 = vmatpush1.msra.mxu0 %v660
        %699 = vmatprep.subr.mxu0 0.0
        %700 = vmatpush1.msra.mxu0 0.0
        %701 = vmatprep.subr.mxu0 0.0
        %702 = vmatpush1.msra.mxu0 0.0
        %703 = vmatprep.subr.mxu0 0.0
        %704 = vmatpush1.msra.mxu0 0.0
        %705 = vmatprep.subr.mxu0 0.0
        %706 = vmatpush1.msra.mxu0 0.0
        %707 = vmatprep.subr.mxu0 0.0
        %708 = vmatpush1.msra.mxu0 0.0
        %709 = vmatprep.subr.mxu0 0.0
        %710 = vmatpush1.msra.mxu0 0.0
        %711 = vmatprep.subr.mxu0 0.0
        %712 = vmatpush1.msra.mxu0 0.0
        %713 = vmatprep.subr.mxu0 0.0
        %714 = vmatpush1.msra.mxu0 0.0
        %715 = vmatprep.subr.mxu0 0.0
        %716 = vmatpush1.msra.mxu0 0.0
        %717 = vmatprep.subr.mxu0 0.0
        %718 = vmatpush1.msra.mxu0 0.0
        %719 = vmatprep.subr.mxu0 0.0
        %720 = vmatpush1.msra.mxu0 0.0
        %721 = vmatprep.subr.mxu0 0.0
        %722 = vmatpush1.msra.mxu0 0.0
        %723 = vmatprep.subr.mxu0 0.0
        %724 = vmatpush1.msra.mxu0 0.0
        %725 = vmatprep.subr.mxu0 0.0
        %726 = vmatpush1.msra.mxu0 0.0
        %727 = vmatprep.subr.mxu0 0.0
        %728 = vmatpush1.msra.mxu0 0.0
        %729 = vmatprep.subr.mxu0 0.0
        %730 = vmatpush1.msra.mxu0 0.0
        %731 = vmatprep.mubr.f32.mxu0 0.0
        %732 = vmatmul.mubr.f32.gmra.mrb[0].mxu0 %v664
        %v733 = vpop.f32.mrb[0].mxu0
        %v734 = vadd.f32 0.0, %v733
        %v735 = vpop.f32.mrb[0].mxu0
        %736 = vmatprep.mubr.f32.mxu0 0.0
        %737 = vmatmul.mubr.f32.gmra.mrb[0].mxu0 %v663
        %v738 = vpop.f32.mrb[0].mxu0
        %v739 = vadd.f32 0.0, %v738
        %v740 = vpop.f32.mrb[0].mxu0
        %741 = vdwg.mxu0
        %v742 = vadd.f32 %v636, %v734
        %v743 = vadd.f32 %v641, %v739
        %v744 = vld [vmem:[%s371] sm:$0xff]
        %v745 = vld [vmem:[%s371 + $0x8] sm:$0xff]
        %s746 = scalar_lea.vmem [#allocation9], 384
        %v747 = vld [vmem:[%s746] sm:$0xff]
        %v748 = vld [vmem:[%s746 + $0x8] sm:$0xff]
        %v749 = vld [vmem:[%s746 + $0x10] sm:$0xff]
        %v750 = vld [vmem:[%s746 + $0x18] sm:$0xff]
        %v751 = vld [vmem:[%s746 + $0x20] sm:$0xff]
        %v752 = vld [vmem:[%s746 + $0x28] sm:$0xff]
        %v753 = vld [vmem:[%s746 + $0x30] sm:$0xff]
        %v754 = vld [vmem:[%s746 + $0x38] sm:$0xff]
        %v755 = vld [vmem:[%s746 + $0x40] sm:$0xff]
        %v756 = vld [vmem:[%s746 + $0x48] sm:$0xff]
        %v757 = vld [vmem:[%s746 + $0x50] sm:$0xff]
        %v758 = vld [vmem:[%s746 + $0x58] sm:$0xff]
        %v759 = vld [vmem:[%s746 + $0x60] sm:$0xff]
        %v760 = vld [vmem:[%s746 + $0x68] sm:$0xff]
        %v761 = vld [vmem:[%s746 + $0x70] sm:$0xff]
        %v762 = vld [vmem:[%s746 + $0x78] sm:$0xff]
        %763 = vmatprep.subr.mxu0 0.0
        %764 = vmatpush1.msra.mxu0 %v747
        %765 = vmatprep.subr.mxu0 0.0
        %766 = vmatpush1.msra.mxu0 %v748
        %767 = vmatprep.subr.mxu0 0.0
        %768 = vmatpush1.msra.mxu0 %v749
        %769 = vmatprep.subr.mxu0 0.0
        %770 = vmatpush1.msra.mxu0 %v750
        %771 = vmatprep.subr.mxu0 0.0
        %772 = vmatpush1.msra.mxu0 %v751
        %773 = vmatprep.subr.mxu0 0.0
        %774 = vmatpush1.msra.mxu0 %v752
        %775 = vmatprep.subr.mxu0 0.0
        %776 = vmatpush1.msra.mxu0 %v753
        %777 = vmatprep.subr.mxu0 0.0
        %778 = vmatpush1.msra.mxu0 %v754
        %779 = vmatprep.subr.mxu0 0.0
        %780 = vmatpush1.msra.mxu0 %v755
        %781 = vmatprep.subr.mxu0 0.0
        %782 = vmatpush1.msra.mxu0 %v756
        %783 = vmatprep.subr.mxu0 0.0
        %784 = vmatpush1.msra.mxu0 %v757
        %785 = vmatprep.subr.mxu0 0.0
        %786 = vmatpush1.msra.mxu0 %v758
        %787 = vmatprep.subr.mxu0 0.0
        %788 = vmatpush1.msra.mxu0 %v759
        %789 = vmatprep.subr.mxu0 0.0
        %790 = vmatpush1.msra.mxu0 %v760
        %791 = vmatprep.subr.mxu0 0.0
        %792 = vmatpush1.msra.mxu0 %v761
        %793 = vmatprep.subr.mxu0 0.0
        %794 = vmatpush1.msra.mxu0 %v762
        %795 = vmatprep.subr.mxu0 0.0
        %796 = vmatpush1.msra.mxu0 0.0
        %797 = vmatprep.subr.mxu0 0.0
        %798 = vmatpush1.msra.mxu0 0.0
        %799 = vmatprep.subr.mxu0 0.0
        %800 = vmatpush1.msra.mxu0 0.0
        %801 = vmatprep.subr.mxu0 0.0
        %802 = vmatpush1.msra.mxu0 0.0
        %803 = vmatprep.subr.mxu0 0.0
        %804 = vmatpush1.msra.mxu0 0.0
        %805 = vmatprep.subr.mxu0 0.0
        %806 = vmatpush1.msra.mxu0 0.0
        %807 = vmatprep.subr.mxu0 0.0
        %808 = vmatpush1.msra.mxu0 0.0
        %809 = vmatprep.subr.mxu0 0.0
        %810 = vmatpush1.msra.mxu0 0.0
        %811 = vmatprep.subr.mxu0 0.0
        %812 = vmatpush1.msra.mxu0 0.0
        %813 = vmatprep.subr.mxu0 0.0
        %814 = vmatpush1.msra.mxu0 0.0
        %815 = vmatprep.subr.mxu0 0.0
        %816 = vmatpush1.msra.mxu0 0.0
        %817 = vmatprep.subr.mxu0 0.0
        %818 = vmatpush1.msra.mxu0 0.0
        %819 = vmatprep.subr.mxu0 0.0
        %820 = vmatpush1.msra.mxu0 0.0
        %821 = vmatprep.subr.mxu0 0.0
        %822 = vmatpush1.msra.mxu0 0.0
        %823 = vmatprep.subr.mxu0 0.0
        %824 = vmatpush1.msra.mxu0 0.0
        %825 = vmatprep.subr.mxu0 0.0
        %826 = vmatpush1.msra.mxu0 0.0
        %827 = vmatprep.mubr.f32.mxu0 0.0
        %828 = vmatmul.mubr.f32.gmra.mrb[0].mxu0 %v744
        %v829 = vpop.f32.mrb[0].mxu0
        %v830 = vadd.f32 0.0, %v829
        %v831 = vpop.f32.mrb[0].mxu0
        %832 = vmatprep.mubr.f32.mxu0 0.0
        %833 = vmatmul.mubr.f32.gmra.mrb[0].mxu0 %v745
        %v834 = vpop.f32.mrb[0].mxu0
        %v835 = vadd.f32 0.0, %v834
        %v836 = vpop.f32.mrb[0].mxu0
        %837 = vdwg.mxu0
        %v838 = vadd.f32 %v742, %v830
        %v839 = vadd.f32 %v743, %v835
        %s840 = scalar_lea.vmem [#allocation9], 512
        %v841 = vld [vmem:[%s840] sm:$0xff]
        %v842 = vld [vmem:[%s840 + $0x8] sm:$0xff]
        %v843 = vld [vmem:[%s840 + $0x10] sm:$0xff]
        %v844 = vld [vmem:[%s840 + $0x18] sm:$0xff]
        %v845 = vld [vmem:[%s840 + $0x20] sm:$0xff]
        %v846 = vld [vmem:[%s840 + $0x28] sm:$0xff]
        %v847 = vld [vmem:[%s840 + $0x30] sm:$0xff]
        %v848 = vld [vmem:[%s840 + $0x38] sm:$0xff]
        %v849 = vld [vmem:[%s840 + $0x40] sm:$0xff]
        %v850 = vld [vmem:[%s840 + $0x48] sm:$0xff]
        %v851 = vld [vmem:[%s840 + $0x50] sm:$0xff]
        %v852 = vld [vmem:[%s840 + $0x58] sm:$0xff]
        %v853 = vld [vmem:[%s840 + $0x60] sm:$0xff]
        %v854 = vld [vmem:[%s840 + $0x68] sm:$0xff]
        %v855 = vld [vmem:[%s840 + $0x70] sm:$0xff]
        %v856 = vld [vmem:[%s840 + $0x78] sm:$0xff]
        %v859 = vrot.slane %v744, 1
        %v860 = vrot.slane %v745, 1
        %v861 = vsel %vm488, %v859, %v860
        %864 = vmatprep.subr.mxu0 0.0
        %865 = vmatpush1.msra.mxu0 %v841
        %866 = vmatprep.subr.mxu0 0.0
        %867 = vmatpush1.msra.mxu0 %v842
        %868 = vmatprep.subr.mxu0 0.0
        %869 = vmatpush1.msra.mxu0 %v843
        %870 = vmatprep.subr.mxu0 0.0
        %871 = vmatpush1.msra.mxu0 %v844
        %872 = vmatprep.subr.mxu0 0.0
        %873 = vmatpush1.msra.mxu0 %v845
        %874 = vmatprep.subr.mxu0 0.0
        %875 = vmatpush1.msra.mxu0 %v846
        %876 = vmatprep.subr.mxu0 0.0
        %877 = vmatpush1.msra.mxu0 %v847
        %878 = vmatprep.subr.mxu0 0.0
        %879 = vmatpush1.msra.mxu0 %v848
        %880 = vmatprep.subr.mxu0 0.0
        %881 = vmatpush1.msra.mxu0 %v849
        %882 = vmatprep.subr.mxu0 0.0
        %883 = vmatpush1.msra.mxu0 %v850
        %884 = vmatprep.subr.mxu0 0.0
        %885 = vmatpush1.msra.mxu0 %v851
        %886 = vmatprep.subr.mxu0 0.0
        %887 = vmatpush1.msra.mxu0 %v852
        %888 = vmatprep.subr.mxu0 0.0
        %889 = vmatpush1.msra.mxu0 %v853
        %890 = vmatprep.subr.mxu0 0.0
        %891 = vmatpush1.msra.mxu0 %v854
        %892 = vmatprep.subr.mxu0 0.0
        %893 = vmatpush1.msra.mxu0 %v855
        %894 = vmatprep.subr.mxu0 0.0
        %895 = vmatpush1.msra.mxu0 %v856
        %896 = vmatprep.subr.mxu0 0.0
        %897 = vmatpush1.msra.mxu0 0.0
        %898 = vmatprep.subr.mxu0 0.0
        %899 = vmatpush1.msra.mxu0 0.0
        %900 = vmatprep.subr.mxu0 0.0
        %901 = vmatpush1.msra.mxu0 0.0
        %902 = vmatprep.subr.mxu0 0.0
        %903 = vmatpush1.msra.mxu0 0.0
        %904 = vmatprep.subr.mxu0 0.0
        %905 = vmatpush1.msra.mxu0 0.0
        %906 = vmatprep.subr.mxu0 0.0
        %907 = vmatpush1.msra.mxu0 0.0
        %908 = vmatprep.subr.mxu0 0.0
        %909 = vmatpush1.msra.mxu0 0.0
        %910 = vmatprep.subr.mxu0 0.0
        %911 = vmatpush1.msra.mxu0 0.0
        %912 = vmatprep.subr.mxu0 0.0
        %913 = vmatpush1.msra.mxu0 0.0
        %914 = vmatprep.subr.mxu0 0.0
        %915 = vmatpush1.msra.mxu0 0.0
        %916 = vmatprep.subr.mxu0 0.0
        %917 = vmatpush1.msra.mxu0 0.0
        %918 = vmatprep.subr.mxu0 0.0
        %919 = vmatpush1.msra.mxu0 0.0
        %920 = vmatprep.subr.mxu0 0.0
        %921 = vmatpush1.msra.mxu0 0.0
        %922 = vmatprep.subr.mxu0 0.0
        %923 = vmatpush1.msra.mxu0 0.0
        %924 = vmatprep.subr.mxu0 0.0
        %925 = vmatpush1.msra.mxu0 0.0
        %926 = vmatprep.subr.mxu0 0.0
        %927 = vmatpush1.msra.mxu0 0.0
        %928 = vmatprep.mubr.f32.mxu0 0.0
        %929 = vmatmul.mubr.f32.gmra.mrb[0].mxu0 %v861
        %v930 = vpop.f32.mrb[0].mxu0
        %v931 = vadd.f32 0.0, %v930
        %v932 = vpop.f32.mrb[0].mxu0
        %933 = vmatprep.mubr.f32.mxu0 0.0
        %934 = vmatmul.mubr.f32.gmra.mrb[0].mxu0 %v860
        %v935 = vpop.f32.mrb[0].mxu0
        %v936 = vadd.f32 0.0, %v935
        %v937 = vpop.f32.mrb[0].mxu0
        %938 = vdwg.mxu0
        %v939 = vadd.f32 %v838, %v931
        %v940 = vadd.f32 %v839, %v936
        %s941 = scalar_lea.vmem [#allocation9], 640
        %v942 = vld [vmem:[%s941] sm:$0xff]
        %v943 = vld [vmem:[%s941 + $0x8] sm:$0xff]
        %v944 = vld [vmem:[%s941 + $0x10] sm:$0xff]
        %v945 = vld [vmem:[%s941 + $0x18] sm:$0xff]
        %v946 = vld [vmem:[%s941 + $0x20] sm:$0xff]
        %v947 = vld [vmem:[%s941 + $0x28] sm:$0xff]
        %v948 = vld [vmem:[%s941 + $0x30] sm:$0xff]
        %v949 = vld [vmem:[%s941 + $0x38] sm:$0xff]
        %v950 = vld [vmem:[%s941 + $0x40] sm:$0xff]
        %v951 = vld [vmem:[%s941 + $0x48] sm:$0xff]
        %v952 = vld [vmem:[%s941 + $0x50] sm:$0xff]
        %v953 = vld [vmem:[%s941 + $0x58] sm:$0xff]
        %v954 = vld [vmem:[%s941 + $0x60] sm:$0xff]
        %v955 = vld [vmem:[%s941 + $0x68] sm:$0xff]
        %v956 = vld [vmem:[%s941 + $0x70] sm:$0xff]
        %v957 = vld [vmem:[%s941 + $0x78] sm:$0xff]
        %v958 = vrot.slane %v744, 2
        %v959 = vrot.slane %v745, 2
        %v960 = vsel %vm661, %v958, %v959
        %963 = vmatprep.subr.mxu0 0.0
        %964 = vmatpush1.msra.mxu0 %v942
        %965 = vmatprep.subr.mxu0 0.0
        %966 = vmatpush1.msra.mxu0 %v943
        %967 = vmatprep.subr.mxu0 0.0
        %968 = vmatpush1.msra.mxu0 %v944
        %969 = vmatprep.subr.mxu0 0.0
        %970 = vmatpush1.msra.mxu0 %v945
        %971 = vmatprep.subr.mxu0 0.0
        %972 = vmatpush1.msra.mxu0 %v946
        %973 = vmatprep.subr.mxu0 0.0
        %974 = vmatpush1.msra.mxu0 %v947
        %975 = vmatprep.subr.mxu0 0.0
        %976 = vmatpush1.msra.mxu0 %v948
        %977 = vmatprep.subr.mxu0 0.0
        %978 = vmatpush1.msra.mxu0 %v949
        %979 = vmatprep.subr.mxu0 0.0
        %980 = vmatpush1.msra.mxu0 %v950
        %981 = vmatprep.subr.mxu0 0.0
        %982 = vmatpush1.msra.mxu0 %v951
        %983 = vmatprep.subr.mxu0 0.0
        %984 = vmatpush1.msra.mxu0 %v952
        %985 = vmatprep.subr.mxu0 0.0
        %986 = vmatpush1.msra.mxu0 %v953
        %987 = vmatprep.subr.mxu0 0.0
        %988 = vmatpush1.msra.mxu0 %v954
        %989 = vmatprep.subr.mxu0 0.0
        %990 = vmatpush1.msra.mxu0 %v955
        %991 = vmatprep.subr.mxu0 0.0
        %992 = vmatpush1.msra.mxu0 %v956
        %993 = vmatprep.subr.mxu0 0.0
        %994 = vmatpush1.msra.mxu0 %v957
        %995 = vmatprep.subr.mxu0 0.0
        %996 = vmatpush1.msra.mxu0 0.0
        %997 = vmatprep.subr.mxu0 0.0
        %998 = vmatpush1.msra.mxu0 0.0
        %999 = vmatprep.subr.mxu0 0.0
        %1000 = vmatpush1.msra.mxu0 0.0
        %1001 = vmatprep.subr.mxu0 0.0
        %1002 = vmatpush1.msra.mxu0 0.0
        %1003 = vmatprep.subr.mxu0 0.0
        %1004 = vmatpush1.msra.mxu0 0.0
        %1005 = vmatprep.subr.mxu0 0.0
        %1006 = vmatpush1.msra.mxu0 0.0
        %1007 = vmatprep.subr.mxu0 0.0
        %1008 = vmatpush1.msra.mxu0 0.0
        %1009 = vmatprep.subr.mxu0 0.0
        %1010 = vmatpush1.msra.mxu0 0.0
        %1011 = vmatprep.subr.mxu0 0.0
        %1012 = vmatpush1.msra.mxu0 0.0
        %1013 = vmatprep.subr.mxu0 0.0
        %1014 = vmatpush1.msra.mxu0 0.0
        %1015 = vmatprep.subr.mxu0 0.0
        %1016 = vmatpush1.msra.mxu0 0.0
        %1017 = vmatprep.subr.mxu0 0.0
        %1018 = vmatpush1.msra.mxu0 0.0
        %1019 = vmatprep.subr.mxu0 0.0
        %1020 = vmatpush1.msra.mxu0 0.0
        %1021 = vmatprep.subr.mxu0 0.0
        %1022 = vmatpush1.msra.mxu0 0.0
        %1023 = vmatprep.subr.mxu0 0.0
        %1024 = vmatpush1.msra.mxu0 0.0
        %1025 = vmatprep.subr.mxu0 0.0
        %1026 = vmatpush1.msra.mxu0 0.0
        %1027 = vmatprep.mubr.f32.mxu0 0.0
        %1028 = vmatmul.mubr.f32.gmra.mrb[0].mxu0 %v960
        %v1029 = vpop.f32.mrb[0].mxu0
        %v1030 = vadd.f32 0.0, %v1029
        %v1031 = vpop.f32.mrb[0].mxu0
        %1032 = vmatprep.mubr.f32.mxu0 0.0
        %1033 = vmatmul.mubr.f32.gmra.mrb[0].mxu0 %v959
        %v1034 = vpop.f32.mrb[0].mxu0
        %v1035 = vadd.f32 0.0, %v1034
        %v1036 = vpop.f32.mrb[0].mxu0
        %1037 = vdwg.mxu0
        %v1038 = vadd.f32 %v939, %v1030
        %v1039 = vadd.f32 %v940, %v1035
        %v1040 = vld [vmem:[%s380] sm:$0xff]
        %v1041 = vld [vmem:[%s380 + $0x8] sm:$0xff]
        %s1042 = scalar_lea.vmem [#allocation9], 768
        %v1043 = vld [vmem:[%s1042] sm:$0xff]
        %v1044 = vld [vmem:[%s1042 + $0x8] sm:$0xff]
        %v1045 = vld [vmem:[%s1042 + $0x10] sm:$0xff]
        %v1046 = vld [vmem:[%s1042 + $0x18] sm:$0xff]
        %v1047 = vld [vmem:[%s1042 + $0x20] sm:$0xff]
        %v1048 = vld [vmem:[%s1042 + $0x28] sm:$0xff]
        %v1049 = vld [vmem:[%s1042 + $0x30] sm:$0xff]
        %v1050 = vld [vmem:[%s1042 + $0x38] sm:$0xff]
        %v1051 = vld [vmem:[%s1042 + $0x40] sm:$0xff]
        %v1052 = vld [vmem:[%s1042 + $0x48] sm:$0xff]
        %v1053 = vld [vmem:[%s1042 + $0x50] sm:$0xff]
        %v1054 = vld [vmem:[%s1042 + $0x58] sm:$0xff]
        %v1055 = vld [vmem:[%s1042 + $0x60] sm:$0xff]
        %v1056 = vld [vmem:[%s1042 + $0x68] sm:$0xff]
        %v1057 = vld [vmem:[%s1042 + $0x70] sm:$0xff]
        %v1058 = vld [vmem:[%s1042 + $0x78] sm:$0xff]
        %1059 = vmatprep.subr.mxu0 0.0
        %1060 = vmatpush1.msra.mxu0 %v1043
        %1061 = vmatprep.subr.mxu0 0.0
        %1062 = vmatpush1.msra.mxu0 %v1044
        %1063 = vmatprep.subr.mxu0 0.0
        %1064 = vmatpush1.msra.mxu0 %v1045
        %1065 = vmatprep.subr.mxu0 0.0
        %1066 = vmatpush1.msra.mxu0 %v1046
        %1067 = vmatprep.subr.mxu0 0.0
        %1068 = vmatpush1.msra.mxu0 %v1047
        %1069 = vmatprep.subr.mxu0 0.0
        %1070 = vmatpush1.msra.mxu0 %v1048
        %1071 = vmatprep.subr.mxu0 0.0
        %1072 = vmatpush1.msra.mxu0 %v1049
        %1073 = vmatprep.subr.mxu0 0.0
        %1074 = vmatpush1.msra.mxu0 %v1050
        %1075 = vmatprep.subr.mxu0 0.0
        %1076 = vmatpush1.msra.mxu0 %v1051
        %1077 = vmatprep.subr.mxu0 0.0
        %1078 = vmatpush1.msra.mxu0 %v1052
        %1079 = vmatprep.subr.mxu0 0.0
        %1080 = vmatpush1.msra.mxu0 %v1053
        %1081 = vmatprep.subr.mxu0 0.0
        %1082 = vmatpush1.msra.mxu0 %v1054
        %1083 = vmatprep.subr.mxu0 0.0
        %1084 = vmatpush1.msra.mxu0 %v1055
        %1085 = vmatprep.subr.mxu0 0.0
        %1086 = vmatpush1.msra.mxu0 %v1056
        %1087 = vmatprep.subr.mxu0 0.0
        %1088 = vmatpush1.msra.mxu0 %v1057
        %1089 = vmatprep.subr.mxu0 0.0
        %1090 = vmatpush1.msra.mxu0 %v1058
        %1091 = vmatprep.subr.mxu0 0.0
        %1092 = vmatpush1.msra.mxu0 0.0
        %1093 = vmatprep.subr.mxu0 0.0
        %1094 = vmatpush1.msra.mxu0 0.0
        %1095 = vmatprep.subr.mxu0 0.0
        %1096 = vmatpush1.msra.mxu0 0.0
        %1097 = vmatprep.subr.mxu0 0.0
        %1098 = vmatpush1.msra.mxu0 0.0
        %1099 = vmatprep.subr.mxu0 0.0
        %1100 = vmatpush1.msra.mxu0 0.0
        %1101 = vmatprep.subr.mxu0 0.0
        %1102 = vmatpush1.msra.mxu0 0.0
        %1103 = vmatprep.subr.mxu0 0.0
        %1104 = vmatpush1.msra.mxu0 0.0
        %1105 = vmatprep.subr.mxu0 0.0
        %1106 = vmatpush1.msra.mxu0 0.0
        %1107 = vmatprep.subr.mxu0 0.0
        %1108 = vmatpush1.msra.mxu0 0.0
        %1109 = vmatprep.subr.mxu0 0.0
        %1110 = vmatpush1.msra.mxu0 0.0
        %1111 = vmatprep.subr.mxu0 0.0
        %1112 = vmatpush1.msra.mxu0 0.0
        %1113 = vmatprep.subr.mxu0 0.0
        %1114 = vmatpush1.msra.mxu0 0.0
        %1115 = vmatprep.subr.mxu0 0.0
        %1116 = vmatpush1.msra.mxu0 0.0
        %1117 = vmatprep.subr.mxu0 0.0
        %1118 = vmatpush1.msra.mxu0 0.0
        %1119 = vmatprep.subr.mxu0 0.0
        %1120 = vmatpush1.msra.mxu0 0.0
        %1121 = vmatprep.subr.mxu0 0.0
        %1122 = vmatpush1.msra.mxu0 0.0
        %1123 = vmatprep.mubr.f32.mxu0 0.0
        %1124 = vmatmul.mubr.f32.gmra.mrb[0].mxu0 %v1040
        %v1125 = vpop.f32.mrb[0].mxu0
        %v1126 = vadd.f32 0.0, %v1125
        %v1127 = vpop.f32.mrb[0].mxu0
        %1128 = vmatprep.mubr.f32.mxu0 0.0
        %1129 = vmatmul.mubr.f32.gmra.mrb[0].mxu0 %v1041
        %v1130 = vpop.f32.mrb[0].mxu0
        %v1131 = vadd.f32 0.0, %v1130
        %v1132 = vpop.f32.mrb[0].mxu0
        %1133 = vdwg.mxu0
        %v1134 = vadd.f32 %v1038, %v1126
        %v1135 = vadd.f32 %v1039, %v1131
        %s1136 = scalar_lea.vmem [#allocation9], 896
        %v1137 = vld [vmem:[%s1136] sm:$0xff]
        %v1138 = vld [vmem:[%s1136 + $0x8] sm:$0xff]
        %v1139 = vld [vmem:[%s1136 + $0x10] sm:$0xff]
        %v1140 = vld [vmem:[%s1136 + $0x18] sm:$0xff]
        %v1141 = vld [vmem:[%s1136 + $0x20] sm:$0xff]
        %v1142 = vld [vmem:[%s1136 + $0x28] sm:$0xff]
        %v1143 = vld [vmem:[%s1136 + $0x30] sm:$0xff]
        %v1144 = vld [vmem:[%s1136 + $0x38] sm:$0xff]
        %v1145 = vld [vmem:[%s1136 + $0x40] sm:$0xff]
        %v1146 = vld [vmem:[%s1136 + $0x48] sm:$0xff]
        %v1147 = vld [vmem:[%s1136 + $0x50] sm:$0xff]
        %v1148 = vld [vmem:[%s1136 + $0x58] sm:$0xff]
        %v1149 = vld [vmem:[%s1136 + $0x60] sm:$0xff]
        %v1150 = vld [vmem:[%s1136 + $0x68] sm:$0xff]
        %v1151 = vld [vmem:[%s1136 + $0x70] sm:$0xff]
        %v1152 = vld [vmem:[%s1136 + $0x78] sm:$0xff]
        %v1155 = vrot.slane %v1040, 1
        %v1156 = vrot.slane %v1041, 1
        %v1157 = vsel %vm488, %v1155, %v1156
        %1160 = vmatprep.subr.mxu0 0.0
        %1161 = vmatpush1.msra.mxu0 %v1137
        %1162 = vmatprep.subr.mxu0 0.0
        %1163 = vmatpush1.msra.mxu0 %v1138
        %1164 = vmatprep.subr.mxu0 0.0
        %1165 = vmatpush1.msra.mxu0 %v1139
        %1166 = vmatprep.subr.mxu0 0.0
        %1167 = vmatpush1.msra.mxu0 %v1140
        %1168 = vmatprep.subr.mxu0 0.0
        %1169 = vmatpush1.msra.mxu0 %v1141
        %1170 = vmatprep.subr.mxu0 0.0
        %1171 = vmatpush1.msra.mxu0 %v1142
        %1172 = vmatprep.subr.mxu0 0.0
        %1173 = vmatpush1.msra.mxu0 %v1143
        %1174 = vmatprep.subr.mxu0 0.0
        %1175 = vmatpush1.msra.mxu0 %v1144
        %1176 = vmatprep.subr.mxu0 0.0
        %1177 = vmatpush1.msra.mxu0 %v1145
        %1178 = vmatprep.subr.mxu0 0.0
        %1179 = vmatpush1.msra.mxu0 %v1146
        %1180 = vmatprep.subr.mxu0 0.0
        %1181 = vmatpush1.msra.mxu0 %v1147
        %1182 = vmatprep.subr.mxu0 0.0
        %1183 = vmatpush1.msra.mxu0 %v1148
        %1184 = vmatprep.subr.mxu0 0.0
        %1185 = vmatpush1.msra.mxu0 %v1149
        %1186 = vmatprep.subr.mxu0 0.0
        %1187 = vmatpush1.msra.mxu0 %v1150
        %1188 = vmatprep.subr.mxu0 0.0
        %1189 = vmatpush1.msra.mxu0 %v1151
        %1190 = vmatprep.subr.mxu0 0.0
        %1191 = vmatpush1.msra.mxu0 %v1152
        %1192 = vmatprep.subr.mxu0 0.0
        %1193 = vmatpush1.msra.mxu0 0.0
        %1194 = vmatprep.subr.mxu0 0.0
        %1195 = vmatpush1.msra.mxu0 0.0
        %1196 = vmatprep.subr.mxu0 0.0
        %1197 = vmatpush1.msra.mxu0 0.0
        %1198 = vmatprep.subr.mxu0 0.0
        %1199 = vmatpush1.msra.mxu0 0.0
        %1200 = vmatprep.subr.mxu0 0.0
        %1201 = vmatpush1.msra.mxu0 0.0
        %1202 = vmatprep.subr.mxu0 0.0
        %1203 = vmatpush1.msra.mxu0 0.0
        %1204 = vmatprep.subr.mxu0 0.0
        %1205 = vmatpush1.msra.mxu0 0.0
        %1206 = vmatprep.subr.mxu0 0.0
        %1207 = vmatpush1.msra.mxu0 0.0
        %1208 = vmatprep.subr.mxu0 0.0
        %1209 = vmatpush1.msra.mxu0 0.0
        %1210 = vmatprep.subr.mxu0 0.0
        %1211 = vmatpush1.msra.mxu0 0.0
        %1212 = vmatprep.subr.mxu0 0.0
        %1213 = vmatpush1.msra.mxu0 0.0
        %1214 = vmatprep.subr.mxu0 0.0
        %1215 = vmatpush1.msra.mxu0 0.0
        %1216 = vmatprep.subr.mxu0 0.0
        %1217 = vmatpush1.msra.mxu0 0.0
        %1218 = vmatprep.subr.mxu0 0.0
        %1219 = vmatpush1.msra.mxu0 0.0
        %1220 = vmatprep.subr.mxu0 0.0
        %1221 = vmatpush1.msra.mxu0 0.0
        %1222 = vmatprep.subr.mxu0 0.0
        %1223 = vmatpush1.msra.mxu0 0.0
        %1224 = vmatprep.mubr.f32.mxu0 0.0
        %1225 = vmatmul.mubr.f32.gmra.mrb[0].mxu0 %v1157
        %v1226 = vpop.f32.mrb[0].mxu0
        %v1227 = vadd.f32 0.0, %v1226
        %v1228 = vpop.f32.mrb[0].mxu0
        %1229 = vmatprep.mubr.f32.mxu0 0.0
        %1230 = vmatmul.mubr.f32.gmra.mrb[0].mxu0 %v1156
        %v1231 = vpop.f32.mrb[0].mxu0
        %v1232 = vadd.f32 0.0, %v1231
        %v1233 = vpop.f32.mrb[0].mxu0
        %1234 = vdwg.mxu0
        %v1235 = vadd.f32 %v1134, %v1227
        %v1236 = vadd.f32 %v1135, %v1232
        %s1237 = scalar_lea.vmem [#allocation9], 1024
        %v1238 = vld [vmem:[%s1237] sm:$0xff]
        %v1239 = vld [vmem:[%s1237 + $0x8] sm:$0xff]
        %v1240 = vld [vmem:[%s1237 + $0x10] sm:$0xff]
        %v1241 = vld [vmem:[%s1237 + $0x18] sm:$0xff]
        %v1242 = vld [vmem:[%s1237 + $0x20] sm:$0xff]
        %v1243 = vld [vmem:[%s1237 + $0x28] sm:$0xff]
        %v1244 = vld [vmem:[%s1237 + $0x30] sm:$0xff]
        %v1245 = vld [vmem:[%s1237 + $0x38] sm:$0xff]
        %v1246 = vld [vmem:[%s1237 + $0x40] sm:$0xff]
        %v1247 = vld [vmem:[%s1237 + $0x48] sm:$0xff]
        %v1248 = vld [vmem:[%s1237 + $0x50] sm:$0xff]
        %v1249 = vld [vmem:[%s1237 + $0x58] sm:$0xff]
        %v1250 = vld [vmem:[%s1237 + $0x60] sm:$0xff]
        %v1251 = vld [vmem:[%s1237 + $0x68] sm:$0xff]
        %v1252 = vld [vmem:[%s1237 + $0x70] sm:$0xff]
        %v1253 = vld [vmem:[%s1237 + $0x78] sm:$0xff]
        %v1254 = vrot.slane %v1040, 2
        %v1255 = vrot.slane %v1041, 2
        %v1256 = vsel %vm661, %v1254, %v1255
        %1259 = vmatprep.subr.mxu0 0.0
        %1260 = vmatpush1.msra.mxu0 %v1238
        %1261 = vmatprep.subr.mxu0 0.0
        %1262 = vmatpush1.msra.mxu0 %v1239
        %1263 = vmatprep.subr.mxu0 0.0
        %1264 = vmatpush1.msra.mxu0 %v1240
        %1265 = vmatprep.subr.mxu0 0.0
        %1266 = vmatpush1.msra.mxu0 %v1241
        %1267 = vmatprep.subr.mxu0 0.0
        %1268 = vmatpush1.msra.mxu0 %v1242
        %1269 = vmatprep.subr.mxu0 0.0
        %1270 = vmatpush1.msra.mxu0 %v1243
        %1271 = vmatprep.subr.mxu0 0.0
        %1272 = vmatpush1.msra.mxu0 %v1244
        %1273 = vmatprep.subr.mxu0 0.0
        %1274 = vmatpush1.msra.mxu0 %v1245
        %1275 = vmatprep.subr.mxu0 0.0
        %1276 = vmatpush1.msra.mxu0 %v1246
        %1277 = vmatprep.subr.mxu0 0.0
        %1278 = vmatpush1.msra.mxu0 %v1247
        %1279 = vmatprep.subr.mxu0 0.0
        %1280 = vmatpush1.msra.mxu0 %v1248
        %1281 = vmatprep.subr.mxu0 0.0
        %1282 = vmatpush1.msra.mxu0 %v1249
        %1283 = vmatprep.subr.mxu0 0.0
        %1284 = vmatpush1.msra.mxu0 %v1250
        %1285 = vmatprep.subr.mxu0 0.0
        %1286 = vmatpush1.msra.mxu0 %v1251
        %1287 = vmatprep.subr.mxu0 0.0
        %1288 = vmatpush1.msra.mxu0 %v1252
        %1289 = vmatprep.subr.mxu0 0.0
        %1290 = vmatpush1.msra.mxu0 %v1253
        %1291 = vmatprep.subr.mxu0 0.0
        %1292 = vmatpush1.msra.mxu0 0.0
        %1293 = vmatprep.subr.mxu0 0.0
        %1294 = vmatpush1.msra.mxu0 0.0
        %1295 = vmatprep.subr.mxu0 0.0
        %1296 = vmatpush1.msra.mxu0 0.0
        %1297 = vmatprep.subr.mxu0 0.0
        %1298 = vmatpush1.msra.mxu0 0.0
        %1299 = vmatprep.subr.mxu0 0.0
        %1300 = vmatpush1.msra.mxu0 0.0
        %1301 = vmatprep.subr.mxu0 0.0
        %1302 = vmatpush1.msra.mxu0 0.0
        %1303 = vmatprep.subr.mxu0 0.0
        %1304 = vmatpush1.msra.mxu0 0.0
        %1305 = vmatprep.subr.mxu0 0.0
        %1306 = vmatpush1.msra.mxu0 0.0
        %1307 = vmatprep.subr.mxu0 0.0
        %1308 = vmatpush1.msra.mxu0 0.0
        %1309 = vmatprep.subr.mxu0 0.0
        %1310 = vmatpush1.msra.mxu0 0.0
        %1311 = vmatprep.subr.mxu0 0.0
        %1312 = vmatpush1.msra.mxu0 0.0
        %1313 = vmatprep.subr.mxu0 0.0
        %1314 = vmatpush1.msra.mxu0 0.0
        %1315 = vmatprep.subr.mxu0 0.0
        %1316 = vmatpush1.msra.mxu0 0.0
        %1317 = vmatprep.subr.mxu0 0.0
        %1318 = vmatpush1.msra.mxu0 0.0
        %1319 = vmatprep.subr.mxu0 0.0
        %1320 = vmatpush1.msra.mxu0 0.0
        %1321 = vmatprep.subr.mxu0 0.0
        %1322 = vmatpush1.msra.mxu0 0.0
        %1323 = vmatprep.mubr.f32.mxu0 0.0
        %1324 = vmatmul.mubr.f32.gmra.mrb[0].mxu0 %v1256
        %v1325 = vpop.f32.mrb[0].mxu0
        %v1326 = vadd.f32 0.0, %v1325
        %v1327 = vpop.f32.mrb[0].mxu0
        %1328 = vmatprep.mubr.f32.mxu0 0.0
        %1329 = vmatmul.mubr.f32.gmra.mrb[0].mxu0 %v1255
        %v1330 = vpop.f32.mrb[0].mxu0
        %v1331 = vadd.f32 0.0, %v1330
        %v1332 = vpop.f32.mrb[0].mxu0
        %1333 = vdwg.mxu0
        %v1334 = vadd.f32 %v1235, %v1326
        %v1335 = vadd.f32 %v1236, %v1331
        %v1336 = vld [vmem:[%s4] sm:$0x1]
        %v1338 = vlaneseq
        %v1339 = vshrl.u32 %v1338, 7
        %v1340 = vsub.s32 0, %v1339
        %v1341 = vrot.slane %v1336, %v1340
        %v1343 = vadd.f32 %v1334, %v1341
        %v1344 = vadd.f32 %v1335, %v1341
        // Predicated region
        $region69: #{tpu_custom_call.1} parent=47 // pred_check
          %p1345 = pneg %p440
        $region70: #{tpu_custom_call.1} parent=47 // pred_check_branch
          %1347 = sbr.rel (%p1345) target = $region72
        $region71: #{tpu_custom_call.1} parent=47 // pred_region
          %v1348 = vld [vmem:[#allocation2] sm:$0x1]
          %v1349 = vsel %vm661, %v1344, 0.0
          %v1350 = vadd.f32 %v1343, %v1349
          %v1351 = vrot.slane %v1350, 4
          %v1352 = vadd.f32 %v1350, %v1351
          %v1353 = vrot.slane %v1352, 2
          %v1354 = vadd.f32 %v1352, %v1353
          %v1355 = vrot.slane %v1354, 1
          %v1356 = vadd.f32 %v1354, %v1355
          %v1357 = vadd.f32 %v1348, %v1356
          %1358 = vst [vmem:[#allocation2] sm:$0x1] %v1357
          %v1359 = vld [vmem:[#allocation3] sm:$0x1]
          %v1360 = vmul.f32 %v1343, %v1343
          %v1361 = vmul.f32 %v1344, %v1344
          %v1362 = vsel %vm661, %v1361, 0.0
          %v1363 = vadd.f32 %v1360, %v1362
          %v1364 = vrot.slane %v1363, 4
          %v1365 = vadd.f32 %v1363, %v1364
          %v1366 = vrot.slane %v1365, 2
          %v1367 = vadd.f32 %v1365, %v1366
          %v1368 = vrot.slane %v1367, 1
          %v1369 = vadd.f32 %v1367, %v1368
          %v1370 = vadd.f32 %v1359, %v1369
          %1371 = vst [vmem:[#allocation3] sm:$0x1] %v1370
        $region72: #{tpu_custom_call.1} parent=47 // pred_fallthru
          _
        %p1372 = scmp.eq.s32.totalorder %s30, 1
        // Predicated region
        $region73: #{tpu_custom_call.1} parent=47 // pred_check
          %p1373 = pneg %p1372
        $region74: #{tpu_custom_call.1} parent=47 // pred_check_branch
          %1375 = sbr.rel (%p1373) target = $region76
        $region75: #{tpu_custom_call.1} parent=47 // pred_region
          %v1376 = vld [vmem:[#allocation2] sm:$0x1]
          %v1377 = vmul.f32 %v1376, 0.0025510204
          %v1378 = vld [vmem:[#allocation3] sm:$0x1]
          %v1379 = vmul.f32 %v1378, 0.0025510204
          %v1380 = vmul.f32 %v1377, %v1377
          %v1381 = vsub.f32 %v1379, %v1380
          %v1382 = vmax.f32 %v1381, 0.0
          %v1383 = vadd.f32 %v1382, 1e-05
          %v1384 = vrsqrt.pop %v1383
          %v1385 = vld [vmem:[%s5] sm:$0x1]
          %v1387 = vlaneseq
          %v1388 = vshrl.u32 %v1387, 7
          %v1389 = vsub.s32 0, %v1388
          %v1390 = vrot.slane %v1377, %v1389
          %v1392 = vsub.f32 %v1343, %v1390
          %v1393 = vsub.f32 %v1344, %v1390
          %v1395 = vlaneseq
          %v1396 = vshrl.u32 %v1395, 7
          %v1397 = vsub.s32 0, %v1396
          %v1398 = vrot.slane %v1384, %v1397
          %v1400 = vmul.f32 %v1392, %v1398
          %v1401 = vmul.f32 %v1393, %v1398
          %v1403 = vlaneseq
          %v1404 = vshrl.u32 %v1403, 7
          %v1405 = vsub.s32 0, %v1404
          %v1406 = vrot.slane %v1385, %v1405
          %v1408 = vmul.f32 %v1406, %v1400
          %v1409 = vmul.f32 %v1406, %v1401
          %v1410 = vld [vmem:[%s6] sm:$0x1]
          %v1412 = vlaneseq
          %v1413 = vshrl.u32 %v1412, 7
          %v1414 = vsub.s32 0, %v1413
          %v1415 = vrot.slane %v1410, %v1414
          %v1417 = vadd.f32 %v1408, %v1415
          %v1418 = vadd.f32 %v1409, %v1415
          %v1419 = vmax.f32 %v1417, 0.0
          %v1420 = vmax.f32 %v1418, 0.0
          %1421 = vst [vmem:[%s439] sm:$0xff] %v1419
          %1422 = vst [vmem:[%s439 + $0x8] sm:$0x3f] %v1420
        $region76: #{tpu_custom_call.1} parent=47 // pred_fallthru
          _
        %p1423 = scmp.lt.s32.totalorder %s31, 1
        %s1424 = scalar_select %p1423, %s31, 1
        %p1425 = scmp.lt.s32.totalorder %s32, 13
        %s1426 = scalar_select %p1425, %s32, 13
        %s1427 = smul.addr %s1426, 2
        %s1428 = smul.addr %s1424, 28
        %s1429 = sadd.s32 %s1427, %s1428
        %s1430 = smul.addr %s1429, 8
        %s1431 = scalar_lea.vmem %s7, %s1430
        // Predicated region
        $region77: #{tpu_custom_call.1} parent=47 // pred_check
          %p1432 = pneg %p236
        $region78: #{tpu_custom_call.1} parent=47 // pred_check_branch
          %1434 = sbr.rel (%p1432) target = $region80
        $region79: #{tpu_custom_call.1} parent=47 // pred_region
          _
        $region80: #{tpu_custom_call.1} parent=47 // pred_fallthru
          _
      $region48: #{tpu_custom_call.1} parent=5 // pred_fallthru
        _
      %p1435 = scmp.le.s32.totalorder 2, %s20
      // Predicated region
      $region81: #{tpu_custom_call.1} parent=5 // pred_check
        %p1436 = pneg %p1435
      $region82: #{tpu_custom_call.1} parent=5 // pred_check_branch
        %1438 = sbr.rel (%p1436) target = $region84
      $region83: #{tpu_custom_call.1} parent=5 // pred_region
        %s1439 = ssub.s32 %s20, 2
        // Predicated region
        $region85: #{tpu_custom_call.1} parent=83 // pred_check
          %p1440 = pneg %p242
        $region86: #{tpu_custom_call.1} parent=83 // pred_check_branch
          %1442 = sbr.rel (%p1440) target = $region88
        $region87: #{tpu_custom_call.1} parent=83 // pred_region
          %p1443 = scmp.lt.s32.totalorder %s34, 1
          %s1444 = scalar_select %p1443, %s34, 1
          %p1445 = scmp.lt.s32.totalorder %s35, 13
          %s1446 = scalar_select %p1445, %s35, 13
          %s1447 = smul.addr %s1446, 2
          %s1448 = smul.addr %s1444, 28
          %s1449 = sadd.s32 %s1447, %s1448
          %s1450 = smul.addr %s1449, 8
          %s1451 = scalar_lea.vmem %s7, %s1450
        $region88: #{tpu_custom_call.1} parent=83 // pred_fallthru
          _
      $region84: #{tpu_custom_call.1} parent=5 // pred_fallthru
        _
    $region6: #{tpu_custom_call.1} parent=1 // loop_footer
      %s24 = sadd.s32 1, %s20
    $region7: #{tpu_custom_call.1} parent=1 // loop_footer_branch
      %19 = sbr.rel target = $region3
    $region8: #{tpu_custom_call.1} parent=1 // loop_exit
      _
    %1452 = vsyncpa [#allocation5], 1
    %s1453 = scalar_lea.sflag [#allocation5], 1
    %1454 = vsyncpa %s1453, 1
    %1455 = vsyncpa [#allocation7], 1
    %s1456 = scalar_lea.sflag [#allocation7], 1
    %1457 = vsyncpa %s1456, 1
    %1458 = vsyncpa [#allocation10], 1

</llo_original>
